<compile_context>
chip_gen: v5e
topology: v5e:2x2
jax: 0.10.0
libtpu: 0.0.40
codegen_flags: <defaults>
</compile_context>

<pallas_src>
import math
import functools

import jax
import jax.numpy as jnp
from jax.experimental import pallas as pl
from jax.experimental.pallas import tpu as pltpu


# ---------------------------------------------------------------------------
# model hyper-parameters (small, consistent with the module's __init__)
# ---------------------------------------------------------------------------
LATENT_DIM = 16      # latentspeech_dim
D_MODEL    = 32      # output_dim (d_model of the encoder)
NUM_HEADS  = 4
HEAD_DIM   = D_MODEL // NUM_HEADS
HIDDEN_DIM = 64      # dim_feedforward
NUM_LAYERS = 2
BATCH      = 2
SEQ_LEN    = 8
LN_EPS     = 1e-5
MAX_POS    = 2048

# ---------------------------------------------------------------------------
# parameter-slab layout (one (TOTAL_ROWS, 128) f32 buffer holds every param)
# ---------------------------------------------------------------------------
W_ROWS_PER_LAYER = 3 * D_MODEL + HIDDEN_DIM        # wqkv(32)+wo(32)+w1(32)+w2(64)=160
_WQKV_R = 0
_WO_R   = D_MODEL
_W1_R   = 2 * D_MODEL
_W2_R   = 3 * D_MODEL
WEIGHT_SECTION_ROWS = NUM_LAYERS * W_ROWS_PER_LAYER          # 320
WIN_ROW    = WEIGHT_SECTION_ROWS                             # W_in: 16 rows
BIN_ROW    = WEIGHT_SECTION_ROWS + LATENT_DIM                # b_in: 1 row
SMALL_BASE = WEIGHT_SECTION_ROWS + LATENT_DIM + 8            # 8-aligned
SMALL_ROWS_PER_LAYER = 8                                     # bqkv,bo,b1,b2,g1,b1,g2,b2
TOTAL_ROWS = SMALL_BASE + SMALL_ROWS_PER_LAYER * NUM_LAYERS  # 360
SLAB_LANES = 128


# ---------------------------------------------------------------------------
# Pallas kernel: whole batch, full stack, one invocation
# ---------------------------------------------------------------------------
def _layernorm(x, gamma, beta):
    mu = jnp.mean(x, axis=-1, keepdims=True)
    var = jnp.mean((x - mu) ** 2, axis=-1, keepdims=True)
    return (x - mu) * jax.lax.rsqrt(var + LN_EPS) * gamma + beta


def transformer_kernel(x_ref, pos_ref, slab_ref, out_ref, *, batch, seq_len):
    B, T, D, dh, H = batch, seq_len, D_MODEL, HEAD_DIM, NUM_HEADS
    scale = 1.0 / math.sqrt(dh)

    # constant head-selection mask (H, D): mask[h, d] = 1 iff column d belongs
    # to head h.  Built once; replaces all per-head column slicing.
    head_ids = jax.lax.broadcasted_iota(jnp.int32, (H, D), 0)
    col_ids = jax.lax.broadcasted_iota(jnp.int32, (H, D), 1)
    lo = head_ids * dh
    head_mask = jnp.where((col_ids >= lo) & (col_ids < lo + dh),
                          jnp.float32(1.0), jnp.float32(0.0))
    mask_b = head_mask[None, :, None, :]                       # (1, H, 1, D)

    # ---- input projection + positional embedding (whole batch at once) ----
    w_in = slab_ref[WIN_ROW:WIN_ROW + LATENT_DIM, 0:D]
    b_in = slab_ref[BIN_ROW:BIN_ROW + 1, 0:D]
    h = jnp.dot(x_ref[...], w_in, preferred_element_type=jnp.float32) + b_in
    h = (h.reshape(B, T, D) + pos_ref[...][None, :, :]).reshape(B * T, D)

    # ---- encoder layers (post-norm, relu FFN, dropout = 0) ----------------
    for l in range(NUM_LAYERS):
        wb = l * W_ROWS_PER_LAYER
        wqkv = slab_ref[wb + _WQKV_R: wb + _WQKV_R + D, 0:3 * D]
        wo   = slab_ref[wb + _WO_R:   wb + _WO_R + D,   0:D]
        w1   = slab_ref[wb + _W1_R:   wb + _W1_R + D,   0:HIDDEN_DIM]
        w2   = slab_ref[wb + _W2_R:   wb + _W2_R + HIDDEN_DIM, 0:D]
        sb = SMALL_BASE + l * SMALL_ROWS_PER_LAYER
        bqkv = slab_ref[sb + 0: sb + 1, 0:3 * D]
        bo   = slab_ref[sb + 1: sb + 2, 0:D]
        b1   = slab_ref[sb + 2: sb + 3, 0:HIDDEN_DIM]
        b2   = slab_ref[sb + 3: sb + 4, 0:D]
        ln1g = slab_ref[sb + 4: sb + 5, 0:D]
        ln1b = slab_ref[sb + 5: sb + 6, 0:D]
        ln2g = slab_ref[sb + 6: sb + 7, 0:D]
        ln2b = slab_ref[sb + 7: sb + 8, 0:D]

        # fused QKV projection: one (B*T, D) x (D, 3D) matmul
        qkv = jnp.dot(h, wqkv, preferred_element_type=jnp.float32) + bqkv
        q3 = qkv[:, 0:D].reshape(B, T, D)
        k3 = qkv[:, D:2 * D].reshape(B, T, D)
        v3 = qkv[:, 2 * D:3 * D].reshape(B, T, D)

        # per-head Q via broadcast mask; heads folded into the row axis
        # (T == 8 == sublane tile, so these reshapes touch only major axes).
        qm = (q3[:, None, :, :] * mask_b).reshape(B, H * T, D)

        # head-batched attention: two batched dot_generals per layer
        s = jnp.einsum("bzd,bsd->bzs", qm, k3,
                       preferred_element_type=jnp.float32) * scale  # (B, H*T, T)
        s = s - jnp.max(s, axis=-1, keepdims=True)
        p = jnp.exp(s)
        p = p / jnp.sum(p, axis=-1, keepdims=True)                  # exact softmax
        ctx = jnp.einsum("bzs,bsd->bzd", p, v3,
                         preferred_element_type=jnp.float32)        # (B, H*T, D)

        # merge heads back: mask out non-owned columns and sum over H (VPU adds)
        attn = jnp.sum(ctx.reshape(B, H, T, D) * mask_b, axis=1)    # (B, T, D)
        attn = attn.reshape(B * T, D)
        attn = jnp.dot(attn, wo, preferred_element_type=jnp.float32) + bo

        h = _layernorm(h + attn, ln1g, ln1b)

        # feed-forward (relu)
        ff = jnp.dot(h, w1, preferred_element_type=jnp.float32) + b1
        ff = jnp.maximum(ff, 0.0)
        ff = jnp.dot(ff, w2, preferred_element_type=jnp.float32) + b2

        h = _layernorm(h + ff, ln2g, ln2b)

    out_ref[...] = h                                                # (B*T, D)


# ---------------------------------------------------------------------------
# wrapper (hot path: reshape x, slice pos, call the kernel)
# ---------------------------------------------------------------------------
def _full_spec(a):
    nd = a.ndim
    return pl.BlockSpec(a.shape, lambda *_, _nd=nd: (0,) * _nd)


def transformer_forward(x, params):
    B, T, Din = x.shape
    assert Din == LATENT_DIM
    assert T <= MAX_POS, "sequence length exceeds positional-embedding table"

    x2d = x.reshape(B * T, Din)
    pos = params["pos"][:T]                      # (T, D)
    slab = params["slab"]                        # (TOTAL_ROWS, 128)

    inputs = (x2d, pos, slab)
    in_specs = [_full_spec(a) for a in inputs]
    out_specs = pl.BlockSpec((B * T, D_MODEL), lambda *_: (0, 0))

    # advisory cost estimate (kernel is tiny / latency-bound)
    BT = B * T
    flops_layer = (2 * BT * D_MODEL * 3 * D_MODEL            # fused QKV
                   + 2 * B * NUM_HEADS * T * T * D_MODEL * 2  # scores + ctx (masked)
                   + 2 * BT * D_MODEL * D_MODEL               # out proj
                   + 2 * BT * D_MODEL * HIDDEN_DIM * 2)       # FFN
    flops = 2 * BT * Din * D_MODEL + NUM_LAYERS * flops_layer
    transcendentals = NUM_LAYERS * (B * NUM_HEADS * T * T     # exp
                                    + 2 * BT)                 # LN rsqrt
    bytes_accessed = 4 * (x2d.size + pos.size + slab.size + BT * D_MODEL)

    out2d = pl.pallas_call(
        functools.partial(transformer_kernel, batch=B, seq_len=T),
        out_shape=jax.ShapeDtypeStruct((B * T, D_MODEL), jnp.float32),
        in_specs=in_specs,
        out_specs=out_specs,
        compiler_params=pltpu.CompilerParams(vmem_limit_bytes=16 * 1024 * 1024),
        cost_estimate=pl.CostEstimate(
            flops=flops,
            transcendentals=transcendentals,
            bytes_accessed=bytes_accessed),
    )(*inputs)

    return out2d.reshape(B, T, D_MODEL)


# ---------------------------------------------------------------------------
# deterministic parameter init + sinusoidal positional encoding + slab packing
# ---------------------------------------------------------------------------
def sinusoidal_pos_encoding(seq_len, model_dim):
    position = jnp.arange(seq_len, dtype=jnp.float32)[:, None]          # (S,1)
    div_term = jnp.exp(jnp.arange(0, model_dim, 2, dtype=jnp.float32)
                       * (-math.log(10000.0) / model_dim))              # (D/2,)
    ang = position * div_term                                           # (S,D/2)
    pe = jnp.stack([jnp.sin(ang), jnp.cos(ang)], axis=-1)               # even=sin, odd=cos
    return pe.reshape(seq_len, model_dim)


def _pack_slab(p):
    """Pack every learned parameter into one (TOTAL_ROWS, 128) f32 slab."""
    def put(slab, r, mat):
        mat = jnp.asarray(mat, jnp.float32)
        if mat.ndim == 1:
            mat = mat[None, :]
        return slab.at[r:r + mat.shape[0], 0:mat.shape[1]].set(mat)

    slab = jnp.zeros((TOTAL_ROWS, SLAB_LANES), jnp.float32)
    for l in range(NUM_LAYERS):
        wb = l * W_ROWS_PER_LAYER
        wqkv = jnp.concatenate([p["Wq"][l], p["Wk"][l], p["Wv"][l]], axis=-1)
        bqkv = jnp.concatenate([p["bq"][l], p["bk"][l], p["bv"][l]], axis=-1)
        slab = put(slab, wb + _WQKV_R, wqkv)
        slab = put(slab, wb + _WO_R, p["Wo"][l])
        slab = put(slab, wb + _W1_R, p["W1"][l])
        slab = put(slab, wb + _W2_R, p["W2"][l])
        sb = SMALL_BASE + l * SMALL_ROWS_PER_LAYER
        slab = put(slab, sb + 0, bqkv)
        slab = put(slab, sb + 1, p["bo"][l])
        slab = put(slab, sb + 2, p["b1"][l])
        slab = put(slab, sb + 3, p["b2"][l])
        slab = put(slab, sb + 4, p["ln1_g"][l])
        slab = put(slab, sb + 5, p["ln1_b"][l])
        slab = put(slab, sb + 6, p["ln2_g"][l])
        slab = put(slab, sb + 7, p["ln2_b"][l])
    slab = put(slab, WIN_ROW, p["W_in"])
    slab = put(slab, BIN_ROW, p["b_in"])
    return slab


def init_params(key):
    ks = jax.random.split(key, 20)
    L, D, H, Din = NUM_LAYERS, D_MODEL, HIDDEN_DIM, LATENT_DIM
    n = lambda k, shape, s=0.02: (s * jax.random.normal(k, shape)).astype(jnp.float32)
    params = {
        "pos":   sinusoidal_pos_encoding(MAX_POS, D).astype(jnp.float32),
        "W_in":  n(ks[0], (Din, D)),
        "b_in":  n(ks[1], (1, D)),
        "Wq":    n(ks[2], (L, D, D)),  "bq": n(ks[3],  (L, 1, D)),
        "Wk":    n(ks[4], (L, D, D)),  "bk": n(ks[5],  (L, 1, D)),
        "Wv":    n(ks[6], (L, D, D)),  "bv": n(ks[7],  (L, 1, D)),
        "Wo":    n(ks[8], (L, D, D)),  "bo": n(ks[9],  (L, 1, D)),
        "ln1_g": jnp.ones((L, 1, D), jnp.float32),
        "ln1_b": jnp.zeros((L, 1, D), jnp.float32),
        "W1":    n(ks[10], (L, D, H)), "b1": n(ks[11], (L, 1, H)),
        "W2":    n(ks[12], (L, H, D)), "b2": n(ks[13], (L, 1, D)),
        "ln2_g": jnp.ones((L, 1, D), jnp.float32),
        "ln2_b": jnp.zeros((L, 1, D), jnp.float32),
    }
    # pack once at init (hoisted out of the per-call hot path)
    params["slab"] = _pack_slab(params)
    return params


# ---------------------------------------------------------------------------
# pure-JAX reference (same math, no Pallas) for a correctness check
# ---------------------------------------------------------------------------
def reference_forward(x, p):
    T = x.shape[1]
    h = x @ p["W_in"] + p["b_in"] + p["pos"][:T][None]
    scale = 1.0 / math.sqrt(HEAD_DIM)

    def ln(v, g, b):
        mu = v.mean(-1, keepdims=True)
        var = ((v - mu) ** 2).mean(-1, keepdims=True)
        return (v - mu) / jnp.sqrt(var + LN_EPS) * g + b

    for l in range(NUM_LAYERS):
        q = h @ p["Wq"][l] + p["bq"][l]
        k = h @ p["Wk"][l] + p["bk"][l]
        v = h @ p["Wv"][l] + p["bv"][l]
        B = h.shape[0]
        qh = q.reshape(B, T, NUM_HEADS, HEAD_DIM).transpose(0, 2, 1, 3)
        kh = k.reshape(B, T, NUM_HEADS, HEAD_DIM).transpose(0, 2, 1, 3)
        vh = v.reshape(B, T, NUM_HEADS, HEAD_DIM).transpose(0, 2, 1, 3)
        s = jnp.einsum("bhqd,bhkd->bhqk", qh, kh) * scale
        pattn = jax.nn.softmax(s, axis=-1)
        a = jnp.einsum("bhqk,bhkd->bhqd", pattn, vh)
        a = a.transpose(0, 2, 1, 3).reshape(B, T, D_MODEL)
        a = a @ p["Wo"][l] + p["bo"][l]
        h = ln(h + a, p["ln1_g"][l], p["ln1_b"][l])
        ff = jnp.maximum(h @ p["W1"][l] + p["b1"][l], 0.0) @ p["W2"][l] + p["b2"][l]
        h = ln(h + ff, p["ln2_g"][l], p["ln2_b"][l])
    return h


if __name__ == "__main__":
    key = jax.random.PRNGKey(0)
    kx, kp = jax.random.split(key)
    params = init_params(kp)
    x = jax.random.normal(kx, (BATCH, SEQ_LEN, LATENT_DIM), dtype=jnp.float32)

    out = jax.block_until_ready(transformer_forward(x, params))
    ref = jax.block_until_ready(reference_forward(x, params))

    assert out.shape == (BATCH, SEQ_LEN, D_MODEL)
    # exact-softmax kernel (no approx reciprocal): tight tolerance restored
    assert jnp.allclose(out, ref, atol=1e-4, rtol=1e-4), "mismatch vs reference"

    print("KERNEL_OK")
</pallas_src>

<mosaic_0001>
module attributes {stable_mosaic.version = 11 : i64} {
  func.func @transformer_kernel(%arg0: memref<16x16xf32, #tpu.memory_space<vmem>>, %arg1: memref<8x32xf32, #tpu.memory_space<vmem>>, %arg2: memref<360x128xf32, #tpu.memory_space<vmem>>, %arg3: memref<16x32xf32, #tpu.memory_space<vmem>>) attributes {dimension_semantics = [], scalar_prefetch = 0 : i64, scratch_operands = 0 : i64, tpu.core_type = #tpu.core_type<tc>} {
    %0 = tpu.iota {dimensions = array<i32: 0>} : vector<4x32xi32>
    %1 = tpu.iota {dimensions = array<i32: 1>} : vector<4x32xi32>
    %c8_i32 = arith.constant 8 : i32
    %2 = vector.broadcast %c8_i32 : i32 to vector<4x32xi32>
    %3 = arith.muli %0, %2 : vector<4x32xi32>
    %4 = arith.cmpi sge, %1, %3 : vector<4x32xi32>
    %c8_i32_0 = arith.constant 8 : i32
    %5 = vector.broadcast %c8_i32_0 : i32 to vector<4x32xi32>
    %6 = arith.addi %3, %5 : vector<4x32xi32>
    %7 = arith.cmpi slt, %1, %6 : vector<4x32xi32>
    %8 = arith.andi %4, %7 : vector<4x32xi1>
    %cst = arith.constant 1.000000e+00 : f32
    %cst_1 = arith.constant 0.000000e+00 : f32
    %9 = vector.broadcast %cst : f32 to vector<4x32xf32>
    %10 = vector.broadcast %cst_1 : f32 to vector<4x32xf32>
    %11 = arith.select %8, %9, %10 : vector<4x32xi1>, vector<4x32xf32>
    %12 = vector.shape_cast %11 : vector<4x32xf32> to vector<1x4x1x32xf32>
    %c320 = arith.constant 320 : index
    %c0 = arith.constant 0 : index
    %13 = vector.load %arg2[%c320, %c0] : memref<360x128xf32, #tpu.memory_space<vmem>>, vector<16x32xf32>
    %c336 = arith.constant 336 : index
    %c0_2 = arith.constant 0 : index
    %14 = vector.load %arg2[%c336, %c0_2] : memref<360x128xf32, #tpu.memory_space<vmem>>, vector<1x32xf32>
    %c0_3 = arith.constant 0 : index
    %c0_4 = arith.constant 0 : index
    %15 = vector.load %arg0[%c0_3, %c0_4] : memref<16x16xf32, #tpu.memory_space<vmem>>, vector<16x16xf32>
    %cst_5 = arith.constant dense<0.000000e+00> : vector<16x32xf32>
    %16 = tpu.matmul %15, %13, %cst_5 {dimension_numbers = #tpu.dot_dimension_numbers<[1], [0], [0], [1], [0, 0, 1, 1], [], []>} : vector<16x16xf32>, vector<16x32xf32>, vector<16x32xf32> -> vector<16x32xf32>
    %17 = vector.broadcast %14 : vector<1x32xf32> to vector<16x32xf32>
    %18 = arith.addf %16, %17 : vector<16x32xf32>
    %19 = vector.shape_cast %18 : vector<16x32xf32> to vector<2x8x32xf32>
    %c0_6 = arith.constant 0 : index
    %c0_7 = arith.constant 0 : index
    %20 = vector.load %arg1[%c0_6, %c0_7] : memref<8x32xf32, #tpu.memory_space<vmem>>, vector<8x32xf32>
    %21 = vector.shape_cast %20 : vector<8x32xf32> to vector<1x8x32xf32>
    %22 = vector.broadcast %21 : vector<1x8x32xf32> to vector<2x8x32xf32>
    %23 = arith.addf %19, %22 : vector<2x8x32xf32>
    %24 = vector.shape_cast %23 : vector<2x8x32xf32> to vector<16x32xf32>
    %c0_8 = arith.constant 0 : index
    %c0_9 = arith.constant 0 : index
    %25 = vector.load %arg2[%c0_8, %c0_9] : memref<360x128xf32, #tpu.memory_space<vmem>>, vector<32x96xf32>
    %c32 = arith.constant 32 : index
    %c0_10 = arith.constant 0 : index
    %26 = vector.load %arg2[%c32, %c0_10] : memref<360x128xf32, #tpu.memory_space<vmem>>, vector<32x32xf32>
    %c64 = arith.constant 64 : index
    %c0_11 = arith.constant 0 : index
    %27 = vector.load %arg2[%c64, %c0_11] : memref<360x128xf32, #tpu.memory_space<vmem>>, vector<32x64xf32>
    %c96 = arith.constant 96 : index
    %c0_12 = arith.constant 0 : index
    %28 = vector.load %arg2[%c96, %c0_12] : memref<360x128xf32, #tpu.memory_space<vmem>>, vector<64x32xf32>
    %c344 = arith.constant 344 : index
    %c0_13 = arith.constant 0 : index
    %29 = vector.load %arg2[%c344, %c0_13] : memref<360x128xf32, #tpu.memory_space<vmem>>, vector<1x96xf32>
    %c345 = arith.constant 345 : index
    %c0_14 = arith.constant 0 : index
    %30 = vector.load %arg2[%c345, %c0_14] : memref<360x128xf32, #tpu.memory_space<vmem>>, vector<1x32xf32>
    %c346 = arith.constant 346 : index
    %c0_15 = arith.constant 0 : index
    %31 = vector.load %arg2[%c346, %c0_15] : memref<360x128xf32, #tpu.memory_space<vmem>>, vector<1x64xf32>
    %c347 = arith.constant 347 : index
    %c0_16 = arith.constant 0 : index
    %32 = vector.load %arg2[%c347, %c0_16] : memref<360x128xf32, #tpu.memory_space<vmem>>, vector<1x32xf32>
    %c348 = arith.constant 348 : index
    %c0_17 = arith.constant 0 : index
    %33 = vector.load %arg2[%c348, %c0_17] : memref<360x128xf32, #tpu.memory_space<vmem>>, vector<1x32xf32>
    %c349 = arith.constant 349 : index
    %c0_18 = arith.constant 0 : index
    %34 = vector.load %arg2[%c349, %c0_18] : memref<360x128xf32, #tpu.memory_space<vmem>>, vector<1x32xf32>
    %c350 = arith.constant 350 : index
    %c0_19 = arith.constant 0 : index
    %35 = vector.load %arg2[%c350, %c0_19] : memref<360x128xf32, #tpu.memory_space<vmem>>, vector<1x32xf32>
    %c351 = arith.constant 351 : index
    %c0_20 = arith.constant 0 : index
    %36 = vector.load %arg2[%c351, %c0_20] : memref<360x128xf32, #tpu.memory_space<vmem>>, vector<1x32xf32>
    %cst_21 = arith.constant dense<0.000000e+00> : vector<16x96xf32>
    %37 = tpu.matmul %24, %25, %cst_21 {dimension_numbers = #tpu.dot_dimension_numbers<[1], [0], [0], [1], [0, 0, 1, 1], [], []>} : vector<16x32xf32>, vector<32x96xf32>, vector<16x96xf32> -> vector<16x96xf32>
    %38 = vector.broadcast %29 : vector<1x96xf32> to vector<16x96xf32>
    %39 = arith.addf %37, %38 : vector<16x96xf32>
    %40 = vector.extract_strided_slice %39 {offsets = [0, 0], sizes = [16, 32], strides = [1, 1]} : vector<16x96xf32> to vector<16x32xf32>
    %41 = vector.shape_cast %40 : vector<16x32xf32> to vector<2x8x32xf32>
    %42 = vector.extract_strided_slice %39 {offsets = [0, 32], sizes = [16, 32], strides = [1, 1]} : vector<16x96xf32> to vector<16x32xf32>
    %43 = vector.shape_cast %42 : vector<16x32xf32> to vector<2x8x32xf32>
    %44 = vector.extract_strided_slice %39 {offsets = [0, 64], sizes = [16, 32], strides = [1, 1]} : vector<16x96xf32> to vector<16x32xf32>
    %45 = vector.shape_cast %44 : vector<16x32xf32> to vector<2x8x32xf32>
    %46 = vector.shape_cast %41 : vector<2x8x32xf32> to vector<2x1x8x32xf32>
    %47 = vector.broadcast %46 : vector<2x1x8x32xf32> to vector<2x4x8x32xf32>
    %48 = vector.broadcast %12 : vector<1x4x1x32xf32> to vector<2x4x8x32xf32>
    %49 = arith.mulf %47, %48 : vector<2x4x8x32xf32>
    %50 = vector.shape_cast %49 : vector<2x4x8x32xf32> to vector<2x32x32xf32>
    "tpu.trace_start"() <{level = 10 : i32, message = "bzd,bsd->bzs"}> : () -> ()
    %cst_22 = arith.constant dense<0.000000e+00> : vector<2x32x8xf32>
    %51 = tpu.matmul %50, %43, %cst_22 {dimension_numbers = #tpu.dot_dimension_numbers<[2], [2], [1], [1], [0, 0, 0, 1, 1, 1], [0], [0]>} : vector<2x32x32xf32>, vector<2x8x32xf32>, vector<2x32x8xf32> -> vector<2x32x8xf32>
    "tpu.trace_stop"() : () -> ()
    %cst_23 = arith.constant 0.353553385 : f32
    %52 = vector.broadcast %cst_23 : f32 to vector<2x32x8xf32>
    %53 = arith.mulf %51, %52 : vector<2x32x8xf32>
    %cst_24 = arith.constant dense<0xFF800000> : vector<2x32xf32>
    %54 = vector.multi_reduction <maximumf>, %53, %cst_24 [2] : vector<2x32x8xf32> to vector<2x32xf32>
    %55 = vector.shape_cast %54 : vector<2x32xf32> to vector<2x32x1xf32>
    %56 = vector.broadcast %55 : vector<2x32x1xf32> to vector<2x32x8xf32>
    %57 = arith.subf %53, %56 : vector<2x32x8xf32>
    %58 = math.exp %57 : vector<2x32x8xf32>
    %cst_25 = arith.constant dense<0.000000e+00> : vector<2x32xf32>
    %59 = vector.multi_reduction <add>, %58, %cst_25 [2] : vector<2x32x8xf32> to vector<2x32xf32>
    %60 = vector.shape_cast %59 : vector<2x32xf32> to vector<2x32x1xf32>
    %61 = vector.broadcast %60 : vector<2x32x1xf32> to vector<2x32x8xf32>
    %62 = arith.divf %58, %61 : vector<2x32x8xf32>
    "tpu.trace_start"() <{level = 10 : i32, message = "bzs,bsd->bzd"}> : () -> ()
    %cst_26 = arith.constant dense<0.000000e+00> : vector<2x32x32xf32>
    %63 = tpu.matmul %62, %45, %cst_26 {dimension_numbers = #tpu.dot_dimension_numbers<[2], [1], [1], [2], [0, 0, 0, 1, 1, 2], [0], [0]>} : vector<2x32x8xf32>, vector<2x8x32xf32>, vector<2x32x32xf32> -> vector<2x32x32xf32>
    "tpu.trace_stop"() : () -> ()
    %64 = vector.shape_cast %63 : vector<2x32x32xf32> to vector<2x4x8x32xf32>
    %65 = vector.broadcast %12 : vector<1x4x1x32xf32> to vector<2x4x8x32xf32>
    %66 = arith.mulf %64, %65 : vector<2x4x8x32xf32>
    %cst_27 = arith.constant dense<0.000000e+00> : vector<2x8x32xf32>
    %67 = vector.multi_reduction <add>, %66, %cst_27 [1] : vector<2x4x8x32xf32> to vector<2x8x32xf32>
    %68 = vector.shape_cast %67 : vector<2x8x32xf32> to vector<16x32xf32>
    %cst_28 = arith.constant dense<0.000000e+00> : vector<16x32xf32>
    %69 = tpu.matmul %68, %26, %cst_28 {dimension_numbers = #tpu.dot_dimension_numbers<[1], [0], [0], [1], [0, 0, 1, 1], [], []>} : vector<16x32xf32>, vector<32x32xf32>, vector<16x32xf32> -> vector<16x32xf32>
    %70 = vector.broadcast %30 : vector<1x32xf32> to vector<16x32xf32>
    %71 = arith.addf %69, %70 : vector<16x32xf32>
    %72 = arith.addf %24, %71 : vector<16x32xf32>
    %cst_29 = arith.constant dense<0.000000e+00> : vector<16xf32>
    %73 = vector.multi_reduction <add>, %72, %cst_29 [1] : vector<16x32xf32> to vector<16xf32>
    %74 = vector.shape_cast %73 : vector<16xf32> to vector<16x1xf32>
    %cst_30 = arith.constant 3.200000e+01 : f32
    %75 = vector.broadcast %cst_30 : f32 to vector<16x1xf32>
    %76 = arith.divf %74, %75 : vector<16x1xf32>
    %77 = vector.broadcast %76 : vector<16x1xf32> to vector<16x32xf32>
    %78 = arith.subf %72, %77 : vector<16x32xf32>
    %79 = arith.mulf %78, %78 : vector<16x32xf32>
    %cst_31 = arith.constant dense<0.000000e+00> : vector<16xf32>
    %80 = vector.multi_reduction <add>, %79, %cst_31 [1] : vector<16x32xf32> to vector<16xf32>
    %81 = vector.shape_cast %80 : vector<16xf32> to vector<16x1xf32>
    %cst_32 = arith.constant 3.200000e+01 : f32
    %82 = vector.broadcast %cst_32 : f32 to vector<16x1xf32>
    %83 = arith.divf %81, %82 : vector<16x1xf32>
    %84 = vector.broadcast %76 : vector<16x1xf32> to vector<16x32xf32>
    %85 = arith.subf %72, %84 : vector<16x32xf32>
    %cst_33 = arith.constant 9.99999974E-6 : f32
    %86 = vector.broadcast %cst_33 : f32 to vector<16x1xf32>
    %87 = arith.addf %83, %86 : vector<16x1xf32>
    %88 = math.rsqrt %87 : vector<16x1xf32>
    %89 = vector.broadcast %88 : vector<16x1xf32> to vector<16x32xf32>
    %90 = arith.mulf %85, %89 : vector<16x32xf32>
    %91 = vector.broadcast %33 : vector<1x32xf32> to vector<16x32xf32>
    %92 = arith.mulf %90, %91 : vector<16x32xf32>
    %93 = vector.broadcast %34 : vector<1x32xf32> to vector<16x32xf32>
    %94 = arith.addf %92, %93 : vector<16x32xf32>
    %cst_34 = arith.constant dense<0.000000e+00> : vector<16x64xf32>
    %95 = tpu.matmul %94, %27, %cst_34 {dimension_numbers = #tpu.dot_dimension_numbers<[1], [0], [0], [1], [0, 0, 1, 1], [], []>} : vector<16x32xf32>, vector<32x64xf32>, vector<16x64xf32> -> vector<16x64xf32>
    %96 = vector.broadcast %31 : vector<1x64xf32> to vector<16x64xf32>
    %97 = arith.addf %95, %96 : vector<16x64xf32>
    %cst_35 = arith.constant 0.000000e+00 : f32
    %98 = vector.broadcast %cst_35 : f32 to vector<16x64xf32>
    %99 = arith.maximumf %97, %98 : vector<16x64xf32>
    %cst_36 = arith.constant dense<0.000000e+00> : vector<16x32xf32>
    %100 = tpu.matmul %99, %28, %cst_36 {dimension_numbers = #tpu.dot_dimension_numbers<[1], [0], [0], [1], [0, 0, 1, 1], [], []>} : vector<16x64xf32>, vector<64x32xf32>, vector<16x32xf32> -> vector<16x32xf32>
    %101 = vector.broadcast %32 : vector<1x32xf32> to vector<16x32xf32>
    %102 = arith.addf %100, %101 : vector<16x32xf32>
    %103 = arith.addf %94, %102 : vector<16x32xf32>
    %cst_37 = arith.constant dense<0.000000e+00> : vector<16xf32>
    %104 = vector.multi_reduction <add>, %103, %cst_37 [1] : vector<16x32xf32> to vector<16xf32>
    %105 = vector.shape_cast %104 : vector<16xf32> to vector<16x1xf32>
    %cst_38 = arith.constant 3.200000e+01 : f32
    %106 = vector.broadcast %cst_38 : f32 to vector<16x1xf32>
    %107 = arith.divf %105, %106 : vector<16x1xf32>
    %108 = vector.broadcast %107 : vector<16x1xf32> to vector<16x32xf32>
    %109 = arith.subf %103, %108 : vector<16x32xf32>
    %110 = arith.mulf %109, %109 : vector<16x32xf32>
    %cst_39 = arith.constant dense<0.000000e+00> : vector<16xf32>
    %111 = vector.multi_reduction <add>, %110, %cst_39 [1] : vector<16x32xf32> to vector<16xf32>
    %112 = vector.shape_cast %111 : vector<16xf32> to vector<16x1xf32>
    %cst_40 = arith.constant 3.200000e+01 : f32
    %113 = vector.broadcast %cst_40 : f32 to vector<16x1xf32>
    %114 = arith.divf %112, %113 : vector<16x1xf32>
    %115 = vector.broadcast %107 : vector<16x1xf32> to vector<16x32xf32>
    %116 = arith.subf %103, %115 : vector<16x32xf32>
    %cst_41 = arith.constant 9.99999974E-6 : f32
    %117 = vector.broadcast %cst_41 : f32 to vector<16x1xf32>
    %118 = arith.addf %114, %117 : vector<16x1xf32>
    %119 = math.rsqrt %118 : vector<16x1xf32>
    %120 = vector.broadcast %119 : vector<16x1xf32> to vector<16x32xf32>
    %121 = arith.mulf %116, %120 : vector<16x32xf32>
    %122 = vector.broadcast %35 : vector<1x32xf32> to vector<16x32xf32>
    %123 = arith.mulf %121, %122 : vector<16x32xf32>
    %124 = vector.broadcast %36 : vector<1x32xf32> to vector<16x32xf32>
    %125 = arith.addf %123, %124 : vector<16x32xf32>
    %c160 = arith.constant 160 : index
    %c0_42 = arith.constant 0 : index
    %126 = vector.load %arg2[%c160, %c0_42] : memref<360x128xf32, #tpu.memory_space<vmem>>, vector<32x96xf32>
    %c192 = arith.constant 192 : index
    %c0_43 = arith.constant 0 : index
    %127 = vector.load %arg2[%c192, %c0_43] : memref<360x128xf32, #tpu.memory_space<vmem>>, vector<32x32xf32>
    %c224 = arith.constant 224 : index
    %c0_44 = arith.constant 0 : index
    %128 = vector.load %arg2[%c224, %c0_44] : memref<360x128xf32, #tpu.memory_space<vmem>>, vector<32x64xf32>
    %c256 = arith.constant 256 : index
    %c0_45 = arith.constant 0 : index
    %129 = vector.load %arg2[%c256, %c0_45] : memref<360x128xf32, #tpu.memory_space<vmem>>, vector<64x32xf32>
    %c352 = arith.constant 352 : index
    %c0_46 = arith.constant 0 : index
    %130 = vector.load %arg2[%c352, %c0_46] : memref<360x128xf32, #tpu.memory_space<vmem>>, vector<1x96xf32>
    %c353 = arith.constant 353 : index
    %c0_47 = arith.constant 0 : index
    %131 = vector.load %arg2[%c353, %c0_47] : memref<360x128xf32, #tpu.memory_space<vmem>>, vector<1x32xf32>
    %c354 = arith.constant 354 : index
    %c0_48 = arith.constant 0 : index
    %132 = vector.load %arg2[%c354, %c0_48] : memref<360x128xf32, #tpu.memory_space<vmem>>, vector<1x64xf32>
    %c355 = arith.constant 355 : index
    %c0_49 = arith.constant 0 : index
    %133 = vector.load %arg2[%c355, %c0_49] : memref<360x128xf32, #tpu.memory_space<vmem>>, vector<1x32xf32>
    %c356 = arith.constant 356 : index
    %c0_50 = arith.constant 0 : index
    %134 = vector.load %arg2[%c356, %c0_50] : memref<360x128xf32, #tpu.memory_space<vmem>>, vector<1x32xf32>
    %c357 = arith.constant 357 : index
    %c0_51 = arith.constant 0 : index
    %135 = vector.load %arg2[%c357, %c0_51] : memref<360x128xf32, #tpu.memory_space<vmem>>, vector<1x32xf32>
    %c358 = arith.constant 358 : index
    %c0_52 = arith.constant 0 : index
    %136 = vector.load %arg2[%c358, %c0_52] : memref<360x128xf32, #tpu.memory_space<vmem>>, vector<1x32xf32>
    %c359 = arith.constant 359 : index
    %c0_53 = arith.constant 0 : index
    %137 = vector.load %arg2[%c359, %c0_53] : memref<360x128xf32, #tpu.memory_space<vmem>>, vector<1x32xf32>
    %cst_54 = arith.constant dense<0.000000e+00> : vector<16x96xf32>
    %138 = tpu.matmul %125, %126, %cst_54 {dimension_numbers = #tpu.dot_dimension_numbers<[1], [0], [0], [1], [0, 0, 1, 1], [], []>} : vector<16x32xf32>, vector<32x96xf32>, vector<16x96xf32> -> vector<16x96xf32>
    %139 = vector.broadcast %130 : vector<1x96xf32> to vector<16x96xf32>
    %140 = arith.addf %138, %139 : vector<16x96xf32>
    %141 = vector.extract_strided_slice %140 {offsets = [0, 0], sizes = [16, 32], strides = [1, 1]} : vector<16x96xf32> to vector<16x32xf32>
    %142 = vector.shape_cast %141 : vector<16x32xf32> to vector<2x8x32xf32>
    %143 = vector.extract_strided_slice %140 {offsets = [0, 32], sizes = [16, 32], strides = [1, 1]} : vector<16x96xf32> to vector<16x32xf32>
    %144 = vector.shape_cast %143 : vector<16x32xf32> to vector<2x8x32xf32>
    %145 = vector.extract_strided_slice %140 {offsets = [0, 64], sizes = [16, 32], strides = [1, 1]} : vector<16x96xf32> to vector<16x32xf32>
    %146 = vector.shape_cast %145 : vector<16x32xf32> to vector<2x8x32xf32>
    %147 = vector.shape_cast %142 : vector<2x8x32xf32> to vector<2x1x8x32xf32>
    %148 = vector.broadcast %147 : vector<2x1x8x32xf32> to vector<2x4x8x32xf32>
    %149 = vector.broadcast %12 : vector<1x4x1x32xf32> to vector<2x4x8x32xf32>
    %150 = arith.mulf %148, %149 : vector<2x4x8x32xf32>
    %151 = vector.shape_cast %150 : vector<2x4x8x32xf32> to vector<2x32x32xf32>
    "tpu.trace_start"() <{level = 10 : i32, message = "bzd,bsd->bzs"}> : () -> ()
    %cst_55 = arith.constant dense<0.000000e+00> : vector<2x32x8xf32>
    %152 = tpu.matmul %151, %144, %cst_55 {dimension_numbers = #tpu.dot_dimension_numbers<[2], [2], [1], [1], [0, 0, 0, 1, 1, 1], [0], [0]>} : vector<2x32x32xf32>, vector<2x8x32xf32>, vector<2x32x8xf32> -> vector<2x32x8xf32>
    "tpu.trace_stop"() : () -> ()
    %cst_56 = arith.constant 0.353553385 : f32
    %153 = vector.broadcast %cst_56 : f32 to vector<2x32x8xf32>
    %154 = arith.mulf %152, %153 : vector<2x32x8xf32>
    %cst_57 = arith.constant dense<0xFF800000> : vector<2x32xf32>
    %155 = vector.multi_reduction <maximumf>, %154, %cst_57 [2] : vector<2x32x8xf32> to vector<2x32xf32>
    %156 = vector.shape_cast %155 : vector<2x32xf32> to vector<2x32x1xf32>
    %157 = vector.broadcast %156 : vector<2x32x1xf32> to vector<2x32x8xf32>
    %158 = arith.subf %154, %157 : vector<2x32x8xf32>
    %159 = math.exp %158 : vector<2x32x8xf32>
    %cst_58 = arith.constant dense<0.000000e+00> : vector<2x32xf32>
    %160 = vector.multi_reduction <add>, %159, %cst_58 [2] : vector<2x32x8xf32> to vector<2x32xf32>
    %161 = vector.shape_cast %160 : vector<2x32xf32> to vector<2x32x1xf32>
    %162 = vector.broadcast %161 : vector<2x32x1xf32> to vector<2x32x8xf32>
    %163 = arith.divf %159, %162 : vector<2x32x8xf32>
    "tpu.trace_start"() <{level = 10 : i32, message = "bzs,bsd->bzd"}> : () -> ()
    %cst_59 = arith.constant dense<0.000000e+00> : vector<2x32x32xf32>
    %164 = tpu.matmul %163, %146, %cst_59 {dimension_numbers = #tpu.dot_dimension_numbers<[2], [1], [1], [2], [0, 0, 0, 1, 1, 2], [0], [0]>} : vector<2x32x8xf32>, vector<2x8x32xf32>, vector<2x32x32xf32> -> vector<2x32x32xf32>
    "tpu.trace_stop"() : () -> ()
    %165 = vector.shape_cast %164 : vector<2x32x32xf32> to vector<2x4x8x32xf32>
    %166 = vector.broadcast %12 : vector<1x4x1x32xf32> to vector<2x4x8x32xf32>
    %167 = arith.mulf %165, %166 : vector<2x4x8x32xf32>
    %cst_60 = arith.constant dense<0.000000e+00> : vector<2x8x32xf32>
    %168 = vector.multi_reduction <add>, %167, %cst_60 [1] : vector<2x4x8x32xf32> to vector<2x8x32xf32>
    %169 = vector.shape_cast %168 : vector<2x8x32xf32> to vector<16x32xf32>
    %cst_61 = arith.constant dense<0.000000e+00> : vector<16x32xf32>
    %170 = tpu.matmul %169, %127, %cst_61 {dimension_numbers = #tpu.dot_dimension_numbers<[1], [0], [0], [1], [0, 0, 1, 1], [], []>} : vector<16x32xf32>, vector<32x32xf32>, vector<16x32xf32> -> vector<16x32xf32>
    %171 = vector.broadcast %131 : vector<1x32xf32> to vector<16x32xf32>
    %172 = arith.addf %170, %171 : vector<16x32xf32>
    %173 = arith.addf %125, %172 : vector<16x32xf32>
    %cst_62 = arith.constant dense<0.000000e+00> : vector<16xf32>
    %174 = vector.multi_reduction <add>, %173, %cst_62 [1] : vector<16x32xf32> to vector<16xf32>
    %175 = vector.shape_cast %174 : vector<16xf32> to vector<16x1xf32>
    %cst_63 = arith.constant 3.200000e+01 : f32
    %176 = vector.broadcast %cst_63 : f32 to vector<16x1xf32>
    %177 = arith.divf %175, %176 : vector<16x1xf32>
    %178 = vector.broadcast %177 : vector<16x1xf32> to vector<16x32xf32>
    %179 = arith.subf %173, %178 : vector<16x32xf32>
    %180 = arith.mulf %179, %179 : vector<16x32xf32>
    %cst_64 = arith.constant dense<0.000000e+00> : vector<16xf32>
    %181 = vector.multi_reduction <add>, %180, %cst_64 [1] : vector<16x32xf32> to vector<16xf32>
    %182 = vector.shape_cast %181 : vector<16xf32> to vector<16x1xf32>
    %cst_65 = arith.constant 3.200000e+01 : f32
    %183 = vector.broadcast %cst_65 : f32 to vector<16x1xf32>
    %184 = arith.divf %182, %183 : vector<16x1xf32>
    %185 = vector.broadcast %177 : vector<16x1xf32> to vector<16x32xf32>
    %186 = arith.subf %173, %185 : vector<16x32xf32>
    %cst_66 = arith.constant 9.99999974E-6 : f32
    %187 = vector.broadcast %cst_66 : f32 to vector<16x1xf32>
    %188 = arith.addf %184, %187 : vector<16x1xf32>
    %189 = math.rsqrt %188 : vector<16x1xf32>
    %190 = vector.broadcast %189 : vector<16x1xf32> to vector<16x32xf32>
    %191 = arith.mulf %186, %190 : vector<16x32xf32>
    %192 = vector.broadcast %134 : vector<1x32xf32> to vector<16x32xf32>
    %193 = arith.mulf %191, %192 : vector<16x32xf32>
    %194 = vector.broadcast %135 : vector<1x32xf32> to vector<16x32xf32>
    %195 = arith.addf %193, %194 : vector<16x32xf32>
    %cst_67 = arith.constant dense<0.000000e+00> : vector<16x64xf32>
    %196 = tpu.matmul %195, %128, %cst_67 {dimension_numbers = #tpu.dot_dimension_numbers<[1], [0], [0], [1], [0, 0, 1, 1], [], []>} : vector<16x32xf32>, vector<32x64xf32>, vector<16x64xf32> -> vector<16x64xf32>
    %197 = vector.broadcast %132 : vector<1x64xf32> to vector<16x64xf32>
    %198 = arith.addf %196, %197 : vector<16x64xf32>
    %cst_68 = arith.constant 0.000000e+00 : f32
    %199 = vector.broadcast %cst_68 : f32 to vector<16x64xf32>
    %200 = arith.maximumf %198, %199 : vector<16x64xf32>
    %cst_69 = arith.constant dense<0.000000e+00> : vector<16x32xf32>
    %201 = tpu.matmul %200, %129, %cst_69 {dimension_numbers = #tpu.dot_dimension_numbers<[1], [0], [0], [1], [0, 0, 1, 1], [], []>} : vector<16x64xf32>, vector<64x32xf32>, vector<16x32xf32> -> vector<16x32xf32>
    %202 = vector.broadcast %133 : vector<1x32xf32> to vector<16x32xf32>
    %203 = arith.addf %201, %202 : vector<16x32xf32>
    %204 = arith.addf %195, %203 : vector<16x32xf32>
    %cst_70 = arith.constant dense<0.000000e+00> : vector<16xf32>
    %205 = vector.multi_reduction <add>, %204, %cst_70 [1] : vector<16x32xf32> to vector<16xf32>
    %206 = vector.shape_cast %205 : vector<16xf32> to vector<16x1xf32>
    %cst_71 = arith.constant 3.200000e+01 : f32
    %207 = vector.broadcast %cst_71 : f32 to vector<16x1xf32>
    %208 = arith.divf %206, %207 : vector<16x1xf32>
    %209 = vector.broadcast %208 : vector<16x1xf32> to vector<16x32xf32>
    %210 = arith.subf %204, %209 : vector<16x32xf32>
    %211 = arith.mulf %210, %210 : vector<16x32xf32>
    %cst_72 = arith.constant dense<0.000000e+00> : vector<16xf32>
    %212 = vector.multi_reduction <add>, %211, %cst_72 [1] : vector<16x32xf32> to vector<16xf32>
    %213 = vector.shape_cast %212 : vector<16xf32> to vector<16x1xf32>
    %cst_73 = arith.constant 3.200000e+01 : f32
    %214 = vector.broadcast %cst_73 : f32 to vector<16x1xf32>
    %215 = arith.divf %213, %214 : vector<16x1xf32>
    %216 = vector.broadcast %208 : vector<16x1xf32> to vector<16x32xf32>
    %217 = arith.subf %204, %216 : vector<16x32xf32>
    %cst_74 = arith.constant 9.99999974E-6 : f32
    %218 = vector.broadcast %cst_74 : f32 to vector<16x1xf32>
    %219 = arith.addf %215, %218 : vector<16x1xf32>
    %220 = math.rsqrt %219 : vector<16x1xf32>
    %221 = vector.broadcast %220 : vector<16x1xf32> to vector<16x32xf32>
    %222 = arith.mulf %217, %221 : vector<16x32xf32>
    %223 = vector.broadcast %136 : vector<1x32xf32> to vector<16x32xf32>
    %224 = arith.mulf %222, %223 : vector<16x32xf32>
    %225 = vector.broadcast %137 : vector<1x32xf32> to vector<16x32xf32>
    %226 = arith.addf %224, %225 : vector<16x32xf32>
    %c0_75 = arith.constant 0 : index
    %c0_76 = arith.constant 0 : index
    %227 = vector.load %arg3[%c0_75, %c0_76] : memref<16x32xf32, #tpu.memory_space<vmem>>, vector<16x32xf32>
    tpu.vector_store %arg3[%c0_75, %c0_76], %226 {strides = array<i32>} : memref<16x32xf32, #tpu.memory_space<vmem>>, vector<16x32xf32>,
    return
  }
}

</mosaic_0001>

<llo_original>
// kernel: tpu_custom_call.1
$region0: #{tpu_custom_call.1}
  #allocation0 [shape = 'u32[]', space=smem, size = 0x4, offset = 0x4, fixed_abs, tag = 'smem constant byte address 0x4 - core index']
  #allocation1 [shape = 'u32[72,128]{1,0:T(1,128)}', space=vmem, size = 0x9000, scoped, tag = 'internal scratch']
  %s0 = inlined_call_operand.hbm [shape: f32[16,16], index: 0, kind: input, shape index: {}]
  %s1 = inlined_call_operand.hbm [shape: f32[8,32], index: 1, kind: input, shape index: {}]
  %s2 = inlined_call_operand.hbm [shape: f32[360,128], index: 2, kind: input, shape index: {}]
  %s3 = inlined_call_operand.hbm [shape: f32[16,32], index: 3, kind: output, shape index: {}]
  %s4 = sld [smem:[#allocation0]]
  $region34: #{tpu_custom_call.1} parent=0
    _
  %s6 = ssub.s32 1, %s4
  %s7 = scalar_select 0, %s6, %s4
  $region1: #{tpu_custom_call.1} parent=0
    #allocation2 [shape = 'u8[8192]{0}', space=vmem, size = 0x2000, scoped, tag = 'input window, operand 0, single buffered']
    #allocation3 [shape = 's32[1]{0}', space=sflag, size = 0x4, scoped, tag = 'scoped memory for tpu_custom_call.1']
    #allocation4 [shape = 's32[1]{0}', space=sflag, size = 0x4, scoped, tag = 'scoped memory for tpu_custom_call.1']
    #allocation5 [shape = 'u8[4096]{0}', space=vmem, size = 0x1000, scoped, tag = 'input window, operand 1, single buffered']
    #allocation6 [shape = 's32[1]{0}', space=sflag, size = 0x4, scoped, tag = 'scoped memory for tpu_custom_call.1']
    #allocation7 [shape = 'u8[184320]{0}', space=vmem, size = 0x2d000, scoped, tag = 'input window, operand 2, single buffered']
    #allocation8 [shape = 'u8[8192]{0}', space=vmem, size = 0x2000, scoped, tag = 'output window, operand 0, single buffered']
    %8 = vsyncpa [#allocation3], 0
    %9 = vsyncpa [#allocation6], 0
    %10 = vsyncpa [#allocation4], 0
    // Predicated region
    $region2: #{tpu_custom_call.1} parent=1 // pred_check
      _
    $region3: #{tpu_custom_call.1} parent=1 // pred_check_branch
      %12 = sbr.rel (0) target = $region5
    $region4: #{tpu_custom_call.1} parent=1 // pred_region
      %14 = vsyncadd [#allocation3], 0
      %s15 = sshll.u32 %s0, 4
      %s16 = int_to_ptr.hbm [resolvable:$true] %s15
      %s17 = sshll.u32 [#allocation2], 4
      %s18 = int_to_ptr.vmem [resolvable:$true] %s17
      %23 = dma.hbm_to_vmem [thread:$0]  %s16, 256, %s18, [#allocation3], 128, 128, 8
    $region5: #{tpu_custom_call.1} parent=1 // pred_fallthru
      _
    // Predicated region
    $region6: #{tpu_custom_call.1} parent=1 // pred_check
      _
    $region7: #{tpu_custom_call.1} parent=1 // pred_check_branch
      %25 = sbr.rel (0) target = $region9
    $region8: #{tpu_custom_call.1} parent=1 // pred_region
      %27 = vsyncadd [#allocation6], 0
      %s29 = sshll.u32 %s1, 4
      %s30 = int_to_ptr.hbm [resolvable:$true] %s29
      %s31 = sshll.u32 [#allocation5], 4
      %s32 = int_to_ptr.vmem [resolvable:$true] %s31
      %34 = dma.hbm_to_vmem [thread:$0]  %s30, 128, %s32, [#allocation6]
    $region9: #{tpu_custom_call.1} parent=1 // pred_fallthru
      _
    // Predicated region
    $region10: #{tpu_custom_call.1} parent=1 // pred_check
      _
    $region11: #{tpu_custom_call.1} parent=1 // pred_check_branch
      %36 = sbr.rel (0) target = $region13
    $region12: #{tpu_custom_call.1} parent=1 // pred_region
      %38 = vsyncadd [#allocation6], 0
      %s39 = sshll.u32 %s2, 4
      %s40 = int_to_ptr.hbm [resolvable:$true] %s39
      %s41 = sshll.u32 [#allocation7], 4
      %s42 = int_to_ptr.vmem [resolvable:$true] %s41
      %47 = dma.hbm_to_vmem [thread:$0]  %s40, 5760, %s42, [#allocation6], 128, 128, 8
    $region13: #{tpu_custom_call.1} parent=1 // pred_fallthru
      _
    // Predicated region
    $region14: #{tpu_custom_call.1} parent=1 // pred_check
      _
    $region15: #{tpu_custom_call.1} parent=1 // pred_check_branch
      %49 = sbr.rel (0) target = $region17
    $region16: #{tpu_custom_call.1} parent=1 // pred_region
      %51 = dma.done [#allocation3], 256
    $region17: #{tpu_custom_call.1} parent=1 // pred_fallthru
      _
    // Predicated region
    $region18: #{tpu_custom_call.1} parent=1 // pred_check
      _
    $region19: #{tpu_custom_call.1} parent=1 // pred_check_branch
      %53 = sbr.rel (0) target = $region21
    $region20: #{tpu_custom_call.1} parent=1 // pred_region
      %55 = dma.done [#allocation6], 128
    $region21: #{tpu_custom_call.1} parent=1 // pred_fallthru
      _
    // Predicated region
    $region22: #{tpu_custom_call.1} parent=1 // pred_check
      _
    $region23: #{tpu_custom_call.1} parent=1 // pred_check_branch
      %57 = sbr.rel (0) target = $region25
    $region24: #{tpu_custom_call.1} parent=1 // pred_region
      %59 = dma.done [#allocation6], 5760
    $region25: #{tpu_custom_call.1} parent=1 // pred_fallthru
      _
    %v60 = vlaneseq
    %v61 = vshrl.u32 %v60, 7
    %v62 = vlaneseq
    %v63 = vand.u32 %v62, 127
    %v64 = vmul.u32 %v61, 8
    %vm65 = vcmp.ge.s32.totalorder %v63, %v64
    %v66 = vadd.s32 %v64, 8
    %vm67 = vcmp.lt.s32.totalorder %v63, %v66
    %vm68 = vmand %vm65, %vm67
    %v69 = vsel %vm68, 1.0, 0.0
    %v71 = vrot.slane %v69, 1
    %v72 = vrot.slane %v69, 2
    %v73 = vrot.slane %v69, 3
    %v74 = vld [vmem:[#allocation7 + $0x140] sm:$0xff]
    %v75 = vld [vmem:[#allocation7 + $0x148] sm:$0xff]
    %v76 = vld [vmem:[#allocation7 + $0x150] sm:$0x1]
    %v77 = vld [vmem:[#allocation2] sm:$0xff]
    %v78 = vld [vmem:[#allocation2 + $0x8] sm:$0xff]
    %v79 = vperm.slane %v76, 0
    %vm80 = vcmask 130048
    %v82 = vsel %vm80, %v77, 0
    %v85 = vsel %vm80, %v78, 0
    %87 = vmatpush.msra.mxu0 0.0
    %88 = vmatpush.msra.mxu0 0.0
    %89 = vmatpush.msra.mxu0 0.0
    %90 = vmatpush.msra.mxu0 0.0
    %91 = vmatpush.msra.mxu0 0.0
    %92 = vmatpush.msra.mxu0 0.0
    %93 = vmatpush.msra.mxu0 0.0
    %94 = vmatpush.msra.mxu0 0.0
    %95 = vmatpush.msra.mxu0 0.0
    %96 = vmatpush.msra.mxu0 0.0
    %97 = vmatpush.msra.mxu0 0.0
    %98 = vmatpush.msra.mxu0 0.0
    %99 = vmatpush.msra.mxu0 0.0
    %100 = vmatpush.msra.mxu0 0.0
    %101 = vmatpush.msra.mxu0 %v75
    %102 = vmatpush.msra.mxu0 %v74
    %103 = vmatmul.f32.gmra.mxu0 %v82
    %v104 = vpop.f32.mrf.mxu0
    %v105 = vadd.f32 %v79, %v104
    %106 = vmatmul.f32.gmra.mxu0 %v85
    %v107 = vpop.f32.mrf.mxu0
    %v108 = vadd.f32 %v79, %v107
    %109 = vdwg.mxu0
    %v110 = vld [vmem:[#allocation5] sm:$0xff]
    %v111 = vadd.f32 %v105, %v110
    %v112 = vadd.f32 %v108, %v110
    %v113 = vld [vmem:[#allocation7] sm:$0xff]
    %v114 = vld [vmem:[#allocation7 + $0x8] sm:$0xff]
    %v115 = vld [vmem:[#allocation7 + $0x10] sm:$0xff]
    %v116 = vld [vmem:[#allocation7 + $0x18] sm:$0xff]
    %v117 = vld [vmem:[#allocation7 + $0x20] sm:$0xff]
    %v118 = vld [vmem:[#allocation7 + $0x28] sm:$0xff]
    %v119 = vld [vmem:[#allocation7 + $0x30] sm:$0xff]
    %v120 = vld [vmem:[#allocation7 + $0x38] sm:$0xff]
    %v121 = vld [vmem:[#allocation7 + $0x40] sm:$0xff]
    %v122 = vld [vmem:[#allocation7 + $0x48] sm:$0xff]
    %v123 = vld [vmem:[#allocation7 + $0x50] sm:$0xff]
    %v124 = vld [vmem:[#allocation7 + $0x58] sm:$0xff]
    %v125 = vld [vmem:[#allocation7 + $0x60] sm:$0xff]
    %v126 = vld [vmem:[#allocation7 + $0x68] sm:$0xff]
    %v127 = vld [vmem:[#allocation7 + $0x70] sm:$0xff]
    %v128 = vld [vmem:[#allocation7 + $0x78] sm:$0xff]
    %v129 = vld [vmem:[#allocation7 + $0x80] sm:$0xff]
    %v130 = vld [vmem:[#allocation7 + $0x88] sm:$0xff]
    %v131 = vld [vmem:[#allocation7 + $0x90] sm:$0xff]
    %v132 = vld [vmem:[#allocation7 + $0x98] sm:$0xff]
    %v133 = vld [vmem:[#allocation7 + $0x158] sm:$0x1]
    %v134 = vld [vmem:[#allocation7 + $0x159] sm:$0x1]
    %v135 = vld [vmem:[#allocation7 + $0x15a] sm:$0x1]
    %v136 = vld [vmem:[#allocation7 + $0x15b] sm:$0x1]
    %v137 = vld [vmem:[#allocation7 + $0x15c] sm:$0x1]
    %v138 = vld [vmem:[#allocation7 + $0x15d] sm:$0x1]
    %v139 = vld [vmem:[#allocation7 + $0x15e] sm:$0x1]
    %v140 = vld [vmem:[#allocation7 + $0x15f] sm:$0x1]
    %v141 = vperm.slane %v133, 0
    %vm142 = vcmask 261120
    %v144 = vsel %vm142, %v111, 0
    %v147 = vsel %vm142, %v112, 0
    %149 = vmatpush.msra.mxu0 0.0
    %150 = vmatpush.msra.mxu0 0.0
    %151 = vmatpush.msra.mxu0 0.0
    %152 = vmatpush.msra.mxu0 0.0
    %153 = vmatpush.msra.mxu0 0.0
    %154 = vmatpush.msra.mxu0 0.0
    %155 = vmatpush.msra.mxu0 0.0
    %156 = vmatpush.msra.mxu0 0.0
    %157 = vmatpush.msra.mxu0 0.0
    %158 = vmatpush.msra.mxu0 0.0
    %159 = vmatpush.msra.mxu0 0.0
    %160 = vmatpush.msra.mxu0 0.0
    %161 = vmatpush.msra.mxu0 %v116
    %162 = vmatpush.msra.mxu0 %v115
    %163 = vmatpush.msra.mxu0 %v114
    %164 = vmatpush.msra.mxu0 %v113
    %165 = vmatmul.f32.gmra.mxu0 %v144
    %v166 = vpop.f32.mrf.mxu0
    %v167 = vadd.f32 %v141, %v166
    %168 = vmatmul.f32.gmra.mxu0 %v147
    %v169 = vpop.f32.mrf.mxu0
    %v170 = vadd.f32 %v141, %v169
    %171 = vdwg.mxu0
    %v172 = vperm.slane %v69, 0
    %v173 = vperm.slane %v71, 0
    %v174 = vperm.slane %v72, 0
    %v175 = vperm.slane %v73, 0
    %v180 = vmul.f32 %v167, %v172
    %v181 = vmul.f32 %v167, %v173
    %v182 = vmul.f32 %v167, %v174
    %v183 = vmul.f32 %v167, %v175
    %v184 = vmul.f32 %v170, %v172
    %v185 = vmul.f32 %v170, %v173
    %v186 = vmul.f32 %v170, %v174
    %v187 = vmul.f32 %v170, %v175
    %189 = vrot.lane.b32.xlu0 %v167, 96
    %v190 = vpop.permute.xlu0 %189
    %v192 = vsel %vm142, %v180, 0
    %v195 = vsel %vm142, %v181, 0
    %v198 = vsel %vm142, %v182, 0
    %v201 = vsel %vm142, %v183, 0
    %v203 = vsel %vm142, %v190, 0
    %205 = vmatpush.xpose.msra.mxu0 0.0
    %206 = vmatpush.xpose.msra.mxu0 0.0
    %207 = vmatpush.xpose.msra.mxu0 0.0
    %208 = vmatpush.xpose.msra.mxu0 0.0
    %209 = vmatpush.xpose.msra.mxu0 0.0
    %210 = vmatpush.xpose.msra.mxu0 0.0
    %211 = vmatpush.xpose.msra.mxu0 0.0
    %212 = vmatpush.xpose.msra.mxu0 0.0
    %213 = vmatpush.xpose.msra.mxu0 0.0
    %214 = vmatpush.xpose.msra.mxu0 0.0
    %215 = vmatpush.xpose.msra.mxu0 0.0
    %216 = vmatpush.xpose.msra.mxu0 0.0
    %217 = vmatpush.xpose.msra.mxu0 0.0
    %218 = vmatpush.xpose.msra.mxu0 0.0
    %219 = vmatpush.xpose.msra.mxu0 0.0
    %220 = vmatpush.xpose.msra.mxu0 %v203
    %221 = vmatmul.f32.gmra.mxu0 %v192
    %v222 = vpop.f32.mrf.mxu0
    %v223 = vadd.f32 0.0, %v222
    %224 = vmatmul.f32.gmra.mxu0 %v195
    %v225 = vpop.f32.mrf.mxu0
    %v226 = vadd.f32 0.0, %v225
    %227 = vmatmul.f32.gmra.mxu0 %v198
    %v228 = vpop.f32.mrf.mxu0
    %v229 = vadd.f32 0.0, %v228
    %230 = vmatmul.f32.gmra.mxu0 %v201
    %v231 = vpop.f32.mrf.mxu0
    %v232 = vadd.f32 0.0, %v231
    %233 = vdwg.mxu0
    %235 = vrot.lane.b32.xlu0 %v170, 96
    %v236 = vpop.permute.xlu0 %235
    %v238 = vsel %vm142, %v184, 0
    %v241 = vsel %vm142, %v185, 0
    %v244 = vsel %vm142, %v186, 0
    %v247 = vsel %vm142, %v187, 0
    %v249 = vsel %vm142, %v236, 0
    %251 = vmatpush.xpose.msra.mxu0 0.0
    %252 = vmatpush.xpose.msra.mxu0 0.0
    %253 = vmatpush.xpose.msra.mxu0 0.0
    %254 = vmatpush.xpose.msra.mxu0 0.0
    %255 = vmatpush.xpose.msra.mxu0 0.0
    %256 = vmatpush.xpose.msra.mxu0 0.0
    %257 = vmatpush.xpose.msra.mxu0 0.0
    %258 = vmatpush.xpose.msra.mxu0 0.0
    %259 = vmatpush.xpose.msra.mxu0 0.0
    %260 = vmatpush.xpose.msra.mxu0 0.0
    %261 = vmatpush.xpose.msra.mxu0 0.0
    %262 = vmatpush.xpose.msra.mxu0 0.0
    %263 = vmatpush.xpose.msra.mxu0 0.0
    %264 = vmatpush.xpose.msra.mxu0 0.0
    %265 = vmatpush.xpose.msra.mxu0 0.0
    %266 = vmatpush.xpose.msra.mxu0 %v249
    %267 = vmatmul.f32.gmra.mxu0 %v238
    %v268 = vpop.f32.mrf.mxu0
    %v269 = vadd.f32 0.0, %v268
    %270 = vmatmul.f32.gmra.mxu0 %v241
    %v271 = vpop.f32.mrf.mxu0
    %v272 = vadd.f32 0.0, %v271
    %273 = vmatmul.f32.gmra.mxu0 %v244
    %v274 = vpop.f32.mrf.mxu0
    %v275 = vadd.f32 0.0, %v274
    %276 = vmatmul.f32.gmra.mxu0 %v247
    %v277 = vpop.f32.mrf.mxu0
    %v278 = vadd.f32 0.0, %v277
    %279 = vdwg.mxu0
    %v280 = vmul.f32 %v223, 0.35355338
    %v281 = vmul.f32 %v226, 0.35355338
    %v282 = vmul.f32 %v229, 0.35355338
    %v283 = vmul.f32 %v232, 0.35355338
    %v284 = vmul.f32 %v269, 0.35355338
    %v285 = vmul.f32 %v272, 0.35355338
    %v286 = vmul.f32 %v275, 0.35355338
    %v287 = vmul.f32 %v278, 0.35355338
    %vm288 = vcmask 64512
    %v289 = vsel %vm288, %v280, -inf
    %290 = vmax.xlane.f32.xlu0 %v289
    %v291 = vpop.xlane.xlu0 %290
    %v292 = vsel %vm288, %v281, -inf
    %293 = vmax.xlane.f32.xlu0 %v292
    %v294 = vpop.xlane.xlu0 %293
    %v295 = vsel %vm288, %v282, -inf
    %296 = vmax.xlane.f32.xlu0 %v295
    %v297 = vpop.xlane.xlu0 %296
    %v298 = vsel %vm288, %v283, -inf
    %299 = vmax.xlane.f32.xlu0 %v298
    %v300 = vpop.xlane.xlu0 %299
    %v301 = vsel %vm288, %v284, -inf
    %302 = vmax.xlane.f32.xlu0 %v301
    %v303 = vpop.xlane.xlu0 %302
    %v304 = vsel %vm288, %v285, -inf
    %305 = vmax.xlane.f32.xlu0 %v304
    %v306 = vpop.xlane.xlu0 %305
    %v307 = vsel %vm288, %v286, -inf
    %308 = vmax.xlane.f32.xlu0 %v307
    %v309 = vpop.xlane.xlu0 %308
    %v310 = vsel %vm288, %v287, -inf
    %311 = vmax.xlane.f32.xlu0 %v310
    %v312 = vpop.xlane.xlu0 %311
    %v313 = vsub.f32 %v280, %v291
    %v314 = vsub.f32 %v281, %v294
    %v315 = vsub.f32 %v282, %v297
    %v316 = vsub.f32 %v283, %v300
    %v317 = vsub.f32 %v284, %v303
    %v318 = vsub.f32 %v285, %v306
    %v319 = vsub.f32 %v286, %v309
    %v320 = vsub.f32 %v287, %v312
    %v321 = vmul.f32 %v313, 1.442695
    %v322 = vpow.pop %v321
    %v323 = vmul.f32 %v314, 1.442695
    %v324 = vpow.pop %v323
    %v325 = vmul.f32 %v315, 1.442695
    %v326 = vpow.pop %v325
    %v327 = vmul.f32 %v316, 1.442695
    %v328 = vpow.pop %v327
    %v329 = vmul.f32 %v317, 1.442695
    %v330 = vpow.pop %v329
    %v331 = vmul.f32 %v318, 1.442695
    %v332 = vpow.pop %v331
    %v333 = vmul.f32 %v319, 1.442695
    %v334 = vpow.pop %v333
    %v335 = vmul.f32 %v320, 1.442695
    %v336 = vpow.pop %v335
    %v337 = vsel %vm288, %v322, 0.0
    %338 = vadd.xlane.f32.xlu0 %v337
    %v339 = vpop.xlane.xlu0 %338
    %v340 = vsel %vm288, %v324, 0.0
    %341 = vadd.xlane.f32.xlu0 %v340
    %v342 = vpop.xlane.xlu0 %341
    %v343 = vsel %vm288, %v326, 0.0
    %344 = vadd.xlane.f32.xlu0 %v343
    %v345 = vpop.xlane.xlu0 %344
    %v346 = vsel %vm288, %v328, 0.0
    %347 = vadd.xlane.f32.xlu0 %v346
    %v348 = vpop.xlane.xlu0 %347
    %v349 = vsel %vm288, %v330, 0.0
    %350 = vadd.xlane.f32.xlu0 %v349
    %v351 = vpop.xlane.xlu0 %350
    %v352 = vsel %vm288, %v332, 0.0
    %353 = vadd.xlane.f32.xlu0 %v352
    %v354 = vpop.xlane.xlu0 %353
    %v355 = vsel %vm288, %v334, 0.0
    %356 = vadd.xlane.f32.xlu0 %v355
    %v357 = vpop.xlane.xlu0 %356
    %v358 = vsel %vm288, %v336, 0.0
    %359 = vadd.xlane.f32.xlu0 %v358
    %v360 = vpop.xlane.xlu0 %359
    %v361 = vrcp.pop %v339
    %v362 = vmul.f32 %v339, %v361
    %v363 = vsub.f32 1.0, %v362
    %v364 = vmul.f32 %v361, %v363
    %v365 = vadd.f32 %v361, %v364
    %vm366 = vweird.f32 %v339
    %vm367 = vweird.f32 %v361
    %vm368 = vmor %vm366, %vm367
    %v369 = vsel %vm368, %v361, %v365
    %v370 = vand.u32 2147483647, %v339
    %vm371 = vcmp.eq.f32.partialorder %v370, 8.507059e+37
    %v372 = vand.u32 %v339, 2147483648
    %v373 = vor.u32 1.1754944e-38, %v372
    %v374 = vsel %vm371, %v373, %v369
    %v375 = vmul.f32 %v322, %v374
    %v376 = vrcp.pop %v342
    %v377 = vmul.f32 %v342, %v376
    %v378 = vsub.f32 1.0, %v377
    %v379 = vmul.f32 %v376, %v378
    %v380 = vadd.f32 %v376, %v379
    %vm381 = vweird.f32 %v342
    %vm382 = vweird.f32 %v376
    %vm383 = vmor %vm381, %vm382
    %v384 = vsel %vm383, %v376, %v380
    %v385 = vand.u32 2147483647, %v342
    %vm386 = vcmp.eq.f32.partialorder %v385, 8.507059e+37
    %v387 = vand.u32 %v342, 2147483648
    %v388 = vor.u32 1.1754944e-38, %v387
    %v389 = vsel %vm386, %v388, %v384
    %v390 = vmul.f32 %v324, %v389
    %v391 = vrcp.pop %v345
    %v392 = vmul.f32 %v345, %v391
    %v393 = vsub.f32 1.0, %v392
    %v394 = vmul.f32 %v391, %v393
    %v395 = vadd.f32 %v391, %v394
    %vm396 = vweird.f32 %v345
    %vm397 = vweird.f32 %v391
    %vm398 = vmor %vm396, %vm397
    %v399 = vsel %vm398, %v391, %v395
    %v400 = vand.u32 2147483647, %v345
    %vm401 = vcmp.eq.f32.partialorder %v400, 8.507059e+37
    %v402 = vand.u32 %v345, 2147483648
    %v403 = vor.u32 1.1754944e-38, %v402
    %v404 = vsel %vm401, %v403, %v399
    %v405 = vmul.f32 %v326, %v404
    %v406 = vrcp.pop %v348
    %v407 = vmul.f32 %v348, %v406
    %v408 = vsub.f32 1.0, %v407
    %v409 = vmul.f32 %v406, %v408
    %v410 = vadd.f32 %v406, %v409
    %vm411 = vweird.f32 %v348
    %vm412 = vweird.f32 %v406
    %vm413 = vmor %vm411, %vm412
    %v414 = vsel %vm413, %v406, %v410
    %v415 = vand.u32 2147483647, %v348
    %vm416 = vcmp.eq.f32.partialorder %v415, 8.507059e+37
    %v417 = vand.u32 %v348, 2147483648
    %v418 = vor.u32 1.1754944e-38, %v417
    %v419 = vsel %vm416, %v418, %v414
    %v420 = vmul.f32 %v328, %v419
    %v421 = vrcp.pop %v351
    %v422 = vmul.f32 %v351, %v421
    %v423 = vsub.f32 1.0, %v422
    %v424 = vmul.f32 %v421, %v423
    %v425 = vadd.f32 %v421, %v424
    %vm426 = vweird.f32 %v351
    %vm427 = vweird.f32 %v421
    %vm428 = vmor %vm426, %vm427
    %v429 = vsel %vm428, %v421, %v425
    %v430 = vand.u32 2147483647, %v351
    %vm431 = vcmp.eq.f32.partialorder %v430, 8.507059e+37
    %v432 = vand.u32 %v351, 2147483648
    %v433 = vor.u32 1.1754944e-38, %v432
    %v434 = vsel %vm431, %v433, %v429
    %v435 = vmul.f32 %v330, %v434
    %v436 = vrcp.pop %v354
    %v437 = vmul.f32 %v354, %v436
    %v438 = vsub.f32 1.0, %v437
    %v439 = vmul.f32 %v436, %v438
    %v440 = vadd.f32 %v436, %v439
    %vm441 = vweird.f32 %v354
    %vm442 = vweird.f32 %v436
    %vm443 = vmor %vm441, %vm442
    %v444 = vsel %vm443, %v436, %v440
    %v445 = vand.u32 2147483647, %v354
    %vm446 = vcmp.eq.f32.partialorder %v445, 8.507059e+37
    %v447 = vand.u32 %v354, 2147483648
    %v448 = vor.u32 1.1754944e-38, %v447
    %v449 = vsel %vm446, %v448, %v444
    %v450 = vmul.f32 %v332, %v449
    %v451 = vrcp.pop %v357
    %v452 = vmul.f32 %v357, %v451
    %v453 = vsub.f32 1.0, %v452
    %v454 = vmul.f32 %v451, %v453
    %v455 = vadd.f32 %v451, %v454
    %vm456 = vweird.f32 %v357
    %vm457 = vweird.f32 %v451
    %vm458 = vmor %vm456, %vm457
    %v459 = vsel %vm458, %v451, %v455
    %v460 = vand.u32 2147483647, %v357
    %vm461 = vcmp.eq.f32.partialorder %v460, 8.507059e+37
    %v462 = vand.u32 %v357, 2147483648
    %v463 = vor.u32 1.1754944e-38, %v462
    %v464 = vsel %vm461, %v463, %v459
    %v465 = vmul.f32 %v334, %v464
    %v466 = vrcp.pop %v360
    %v467 = vmul.f32 %v360, %v466
    %v468 = vsub.f32 1.0, %v467
    %v469 = vmul.f32 %v466, %v468
    %v470 = vadd.f32 %v466, %v469
    %vm471 = vweird.f32 %v360
    %vm472 = vweird.f32 %v466
    %vm473 = vmor %vm471, %vm472
    %v474 = vsel %vm473, %v466, %v470
    %v475 = vand.u32 2147483647, %v360
    %vm476 = vcmp.eq.f32.partialorder %v475, 8.507059e+37
    %v477 = vand.u32 %v360, 2147483648
    %v478 = vor.u32 1.1754944e-38, %v477
    %v479 = vsel %vm476, %v478, %v474
    %v480 = vmul.f32 %v336, %v479
    %481 = vrot.lane.b32.xlu0 %v167, 64
    %v482 = vpop.permute.xlu0 %481
    %v485 = vsel %vm288, %v375, 0
    %v488 = vsel %vm288, %v390, 0
    %v491 = vsel %vm288, %v405, 0
    %v494 = vsel %vm288, %v420, 0
    %496 = vmatpush.msra.mxu0 0.0
    %497 = vmatpush.msra.mxu0 0.0
    %498 = vmatpush.msra.mxu0 0.0
    %499 = vmatpush.msra.mxu0 0.0
    %500 = vmatpush.msra.mxu0 0.0
    %501 = vmatpush.msra.mxu0 0.0
    %502 = vmatpush.msra.mxu0 0.0
    %503 = vmatpush.msra.mxu0 0.0
    %504 = vmatpush.msra.mxu0 0.0
    %505 = vmatpush.msra.mxu0 0.0
    %506 = vmatpush.msra.mxu0 0.0
    %507 = vmatpush.msra.mxu0 0.0
    %508 = vmatpush.msra.mxu0 0.0
    %509 = vmatpush.msra.mxu0 0.0
    %510 = vmatpush.msra.mxu0 0.0
    %511 = vmatpush.msra.mxu0 %v482
    %512 = vmatmul.f32.gmra.mxu0 %v485
    %v513 = vpop.f32.mrf.mxu0
    %v514 = vadd.f32 0.0, %v513
    %515 = vmatmul.f32.gmra.mxu0 %v488
    %v516 = vpop.f32.mrf.mxu0
    %v517 = vadd.f32 0.0, %v516
    %518 = vmatmul.f32.gmra.mxu0 %v491
    %v519 = vpop.f32.mrf.mxu0
    %v520 = vadd.f32 0.0, %v519
    %521 = vmatmul.f32.gmra.mxu0 %v494
    %v522 = vpop.f32.mrf.mxu0
    %v523 = vadd.f32 0.0, %v522
    %524 = vdwg.mxu0
    %525 = vrot.lane.b32.xlu0 %v170, 64
    %v526 = vpop.permute.xlu0 %525
    %v529 = vsel %vm288, %v435, 0
    %v532 = vsel %vm288, %v450, 0
    %v535 = vsel %vm288, %v465, 0
    %v538 = vsel %vm288, %v480, 0
    %540 = vmatpush.msra.mxu0 0.0
    %541 = vmatpush.msra.mxu0 0.0
    %542 = vmatpush.msra.mxu0 0.0
    %543 = vmatpush.msra.mxu0 0.0
    %544 = vmatpush.msra.mxu0 0.0
    %545 = vmatpush.msra.mxu0 0.0
    %546 = vmatpush.msra.mxu0 0.0
    %547 = vmatpush.msra.mxu0 0.0
    %548 = vmatpush.msra.mxu0 0.0
    %549 = vmatpush.msra.mxu0 0.0
    %550 = vmatpush.msra.mxu0 0.0
    %551 = vmatpush.msra.mxu0 0.0
    %552 = vmatpush.msra.mxu0 0.0
    %553 = vmatpush.msra.mxu0 0.0
    %554 = vmatpush.msra.mxu0 0.0
    %555 = vmatpush.msra.mxu0 %v526
    %556 = vmatmul.f32.gmra.mxu0 %v529
    %v557 = vpop.f32.mrf.mxu0
    %v558 = vadd.f32 0.0, %v557
    %559 = vmatmul.f32.gmra.mxu0 %v532
    %v560 = vpop.f32.mrf.mxu0
    %v561 = vadd.f32 0.0, %v560
    %562 = vmatmul.f32.gmra.mxu0 %v535
    %v563 = vpop.f32.mrf.mxu0
    %v564 = vadd.f32 0.0, %v563
    %565 = vmatmul.f32.gmra.mxu0 %v538
    %v566 = vpop.f32.mrf.mxu0
    %v567 = vadd.f32 0.0, %v566
    %568 = vdwg.mxu0
    %v569 = vmul.f32 %v514, %v172
    %v570 = vmul.f32 %v517, %v173
    %v571 = vmul.f32 %v520, %v174
    %v572 = vmul.f32 %v523, %v175
    %v573 = vmul.f32 %v558, %v172
    %v574 = vmul.f32 %v561, %v173
    %v575 = vmul.f32 %v564, %v174
    %v576 = vmul.f32 %v567, %v175
    %v577 = vsel %vm142, %v569, 0.0
    %v578 = vsel %vm142, %v570, 0.0
    %v579 = vadd.f32 %v577, %v578
    %v580 = vsel %vm142, %v571, 0.0
    %v581 = vadd.f32 %v579, %v580
    %v582 = vsel %vm142, %v572, 0.0
    %v583 = vadd.f32 %v581, %v582
    %v584 = vsel %vm142, %v573, 0.0
    %v585 = vsel %vm142, %v574, 0.0
    %v586 = vadd.f32 %v584, %v585
    %v587 = vsel %vm142, %v575, 0.0
    %v588 = vadd.f32 %v586, %v587
    %v589 = vsel %vm142, %v576, 0.0
    %v590 = vadd.f32 %v588, %v589
    %v591 = vperm.slane %v134, 0
    %v593 = vsel %vm142, %v583, 0
    %v596 = vsel %vm142, %v590, 0
    %598 = vmatpush.msra.mxu0 0.0
    %599 = vmatpush.msra.mxu0 0.0
    %600 = vmatpush.msra.mxu0 0.0
    %601 = vmatpush.msra.mxu0 0.0
    %602 = vmatpush.msra.mxu0 0.0
    %603 = vmatpush.msra.mxu0 0.0
    %604 = vmatpush.msra.mxu0 0.0
    %605 = vmatpush.msra.mxu0 0.0
    %606 = vmatpush.msra.mxu0 0.0
    %607 = vmatpush.msra.mxu0 0.0
    %608 = vmatpush.msra.mxu0 0.0
    %609 = vmatpush.msra.mxu0 0.0
    %610 = vmatpush.msra.mxu0 %v120
    %611 = vmatpush.msra.mxu0 %v119
    %612 = vmatpush.msra.mxu0 %v118
    %613 = vmatpush.msra.mxu0 %v117
    %614 = vmatmul.f32.gmra.mxu0 %v593
    %v615 = vpop.f32.mrf.mxu0
    %v616 = vadd.f32 %v591, %v615
    %617 = vmatmul.f32.gmra.mxu0 %v596
    %v618 = vpop.f32.mrf.mxu0
    %v619 = vadd.f32 %v591, %v618
    %620 = vdwg.mxu0
    %v621 = vadd.f32 %v111, %v616
    %v622 = vadd.f32 %v112, %v619
    %v623 = vsel %vm142, %v621, 0.0
    %624 = vadd.xlane.f32.xlu0 %v623
    %v625 = vpop.xlane.xlu0 %624
    %v626 = vsel %vm142, %v622, 0.0
    %627 = vadd.xlane.f32.xlu0 %v626
    %v628 = vpop.xlane.xlu0 %627
    %v629 = vrcp.pop 32.0
    %v630 = vmul.f32 32.0, %v629
    %v631 = vsub.f32 1.0, %v630
    %v632 = vmul.f32 %v629, %v631
    %v633 = vadd.f32 %v629, %v632
    %vm634 = vweird.f32 %v629
    %v635 = vsel %vm634, %v629, %v633
    %v636 = vmul.f32 %v625, %v635
    %v637 = vmul.f32 %v628, %v635
    %v638 = vsub.f32 %v621, %v636
    %v639 = vsub.f32 %v622, %v637
    %v640 = vmul.f32 %v638, %v638
    %v641 = vmul.f32 %v639, %v639
    %v642 = vsel %vm142, %v640, 0.0
    %643 = vadd.xlane.f32.xlu0 %v642
    %v644 = vpop.xlane.xlu0 %643
    %v645 = vsel %vm142, %v641, 0.0
    %646 = vadd.xlane.f32.xlu0 %v645
    %v647 = vpop.xlane.xlu0 %646
    %v648 = vmul.f32 %v644, %v635
    %v649 = vmul.f32 %v647, %v635
    %v650 = vadd.f32 %v648, 1e-05
    %v651 = vadd.f32 %v649, 1e-05
    %v652 = vrsqrt.pop %v650
    %v653 = vmul.f32 %v652, %v650
    %v654 = vmul.f32 %v653, %v652
    %v655 = vmul.f32 0.5, %v654
    %v656 = vsub.f32 1.5, %v655
    %v657 = vmul.f32 %v652, %v656
    %vm658 = vweird.f32 %v650
    %vm659 = vweird.f32 %v652
    %vm660 = vmor %vm658, %vm659
    %v661 = vsel %vm660, %v652, %v657
    %v662 = vrsqrt.pop %v651
    %v663 = vmul.f32 %v662, %v651
    %v664 = vmul.f32 %v663, %v662
    %v665 = vmul.f32 0.5, %v664
    %v666 = vsub.f32 1.5, %v665
    %v667 = vmul.f32 %v662, %v666
    %vm668 = vweird.f32 %v651
    %vm669 = vweird.f32 %v662
    %vm670 = vmor %vm668, %vm669
    %v671 = vsel %vm670, %v662, %v667
    %v672 = vmul.f32 %v638, %v661
    %v673 = vmul.f32 %v639, %v671
    %v674 = vperm.slane %v137, 0
    %v675 = vmul.f32 %v672, %v674
    %v676 = vmul.f32 %v673, %v674
    %v677 = vperm.slane %v138, 0
    %v678 = vadd.f32 %v675, %v677
    %v679 = vadd.f32 %v676, %v677
    %v680 = vperm.slane %v135, 0
    %v682 = vsel %vm142, %v678, 0
    %v685 = vsel %vm142, %v679, 0
    %687 = vmatpush.msra.mxu0 0.0
    %688 = vmatpush.msra.mxu0 0.0
    %689 = vmatpush.msra.mxu0 0.0
    %690 = vmatpush.msra.mxu0 0.0
    %691 = vmatpush.msra.mxu0 0.0
    %692 = vmatpush.msra.mxu0 0.0
    %693 = vmatpush.msra.mxu0 0.0
    %694 = vmatpush.msra.mxu0 0.0
    %695 = vmatpush.msra.mxu0 0.0
    %696 = vmatpush.msra.mxu0 0.0
    %697 = vmatpush.msra.mxu0 0.0
    %698 = vmatpush.msra.mxu0 0.0
    %699 = vmatpush.msra.mxu0 %v124
    %700 = vmatpush.msra.mxu0 %v123
    %701 = vmatpush.msra.mxu0 %v122
    %702 = vmatpush.msra.mxu0 %v121
    %703 = vmatmul.f32.gmra.mxu0 %v682
    %v704 = vpop.f32.mrf.mxu0
    %v705 = vadd.f32 %v680, %v704
    %706 = vmatmul.f32.gmra.mxu0 %v685
    %v707 = vpop.f32.mrf.mxu0
    %v708 = vadd.f32 %v680, %v707
    %709 = vdwg.mxu0
    %v710 = vmax.f32 %v705, 0.0
    %v711 = vmax.f32 %v708, 0.0
    %v712 = vperm.slane %v136, 0
    %vm713 = vcmask 523264
    %v715 = vsel %vm713, %v710, 0
    %v718 = vsel %vm713, %v711, 0
    %720 = vmatpush.msra.mxu0 0.0
    %721 = vmatpush.msra.mxu0 0.0
    %722 = vmatpush.msra.mxu0 0.0
    %723 = vmatpush.msra.mxu0 0.0
    %724 = vmatpush.msra.mxu0 0.0
    %725 = vmatpush.msra.mxu0 0.0
    %726 = vmatpush.msra.mxu0 0.0
    %727 = vmatpush.msra.mxu0 0.0
    %728 = vmatpush.msra.mxu0 %v132
    %729 = vmatpush.msra.mxu0 %v131
    %730 = vmatpush.msra.mxu0 %v130
    %731 = vmatpush.msra.mxu0 %v129
    %732 = vmatpush.msra.mxu0 %v128
    %733 = vmatpush.msra.mxu0 %v127
    %734 = vmatpush.msra.mxu0 %v126
    %735 = vmatpush.msra.mxu0 %v125
    %736 = vmatmul.f32.gmra.mxu0 %v715
    %v737 = vpop.f32.mrf.mxu0
    %v738 = vadd.f32 %v712, %v737
    %739 = vmatmul.f32.gmra.mxu0 %v718
    %v740 = vpop.f32.mrf.mxu0
    %v741 = vadd.f32 %v712, %v740
    %742 = vdwg.mxu0
    %v743 = vadd.f32 %v678, %v738
    %v744 = vadd.f32 %v679, %v741
    %v745 = vsel %vm142, %v743, 0.0
    %746 = vadd.xlane.f32.xlu0 %v745
    %v747 = vpop.xlane.xlu0 %746
    %v748 = vsel %vm142, %v744, 0.0
    %749 = vadd.xlane.f32.xlu0 %v748
    %v750 = vpop.xlane.xlu0 %749
    %v751 = vmul.f32 %v747, %v635
    %v752 = vmul.f32 %v750, %v635
    %v753 = vsub.f32 %v743, %v751
    %v754 = vsub.f32 %v744, %v752
    %v755 = vmul.f32 %v753, %v753
    %v756 = vmul.f32 %v754, %v754
    %v757 = vsel %vm142, %v755, 0.0
    %758 = vadd.xlane.f32.xlu0 %v757
    %v759 = vpop.xlane.xlu0 %758
    %v760 = vsel %vm142, %v756, 0.0
    %761 = vadd.xlane.f32.xlu0 %v760
    %v762 = vpop.xlane.xlu0 %761
    %v763 = vmul.f32 %v759, %v635
    %v764 = vmul.f32 %v762, %v635
    %v765 = vadd.f32 %v763, 1e-05
    %v766 = vadd.f32 %v764, 1e-05
    %v767 = vrsqrt.pop %v765
    %v768 = vmul.f32 %v767, %v765
    %v769 = vmul.f32 %v768, %v767
    %v770 = vmul.f32 0.5, %v769
    %v771 = vsub.f32 1.5, %v770
    %v772 = vmul.f32 %v767, %v771
    %vm773 = vweird.f32 %v765
    %vm774 = vweird.f32 %v767
    %vm775 = vmor %vm773, %vm774
    %v776 = vsel %vm775, %v767, %v772
    %v777 = vrsqrt.pop %v766
    %v778 = vmul.f32 %v777, %v766
    %v779 = vmul.f32 %v778, %v777
    %v780 = vmul.f32 0.5, %v779
    %v781 = vsub.f32 1.5, %v780
    %v782 = vmul.f32 %v777, %v781
    %vm783 = vweird.f32 %v766
    %vm784 = vweird.f32 %v777
    %vm785 = vmor %vm783, %vm784
    %v786 = vsel %vm785, %v777, %v782
    %v787 = vmul.f32 %v753, %v776
    %v788 = vmul.f32 %v754, %v786
    %v789 = vperm.slane %v139, 0
    %v790 = vmul.f32 %v787, %v789
    %v791 = vmul.f32 %v788, %v789
    %v792 = vperm.slane %v140, 0
    %v793 = vadd.f32 %v790, %v792
    %v794 = vadd.f32 %v791, %v792
    %v795 = vld [vmem:[#allocation7 + $0xa0] sm:$0xff]
    %v796 = vld [vmem:[#allocation7 + $0xa8] sm:$0xff]
    %v797 = vld [vmem:[#allocation7 + $0xb0] sm:$0xff]
    %v798 = vld [vmem:[#allocation7 + $0xb8] sm:$0xff]
    %v799 = vld [vmem:[#allocation7 + $0xc0] sm:$0xff]
    %v800 = vld [vmem:[#allocation7 + $0xc8] sm:$0xff]
    %v801 = vld [vmem:[#allocation7 + $0xd0] sm:$0xff]
    %v802 = vld [vmem:[#allocation7 + $0xd8] sm:$0xff]
    %v803 = vld [vmem:[#allocation7 + $0xe0] sm:$0xff]
    %v804 = vld [vmem:[#allocation7 + $0xe8] sm:$0xff]
    %v805 = vld [vmem:[#allocation7 + $0xf0] sm:$0xff]
    %v806 = vld [vmem:[#allocation7 + $0xf8] sm:$0xff]
    %v807 = vld [vmem:[#allocation7 + $0x100] sm:$0xff]
    %v808 = vld [vmem:[#allocation7 + $0x108] sm:$0xff]
    %v809 = vld [vmem:[#allocation7 + $0x110] sm:$0xff]
    %v810 = vld [vmem:[#allocation7 + $0x118] sm:$0xff]
    %v811 = vld [vmem:[#allocation7 + $0x120] sm:$0xff]
    %v812 = vld [vmem:[#allocation7 + $0x128] sm:$0xff]
    %v813 = vld [vmem:[#allocation7 + $0x130] sm:$0xff]
    %v814 = vld [vmem:[#allocation7 + $0x138] sm:$0xff]
    %v815 = vld [vmem:[#allocation7 + $0x160] sm:$0x1]
    %v816 = vld [vmem:[#allocation7 + $0x161] sm:$0x1]
    %v817 = vld [vmem:[#allocation7 + $0x162] sm:$0x1]
    %v818 = vld [vmem:[#allocation7 + $0x163] sm:$0x1]
    %v819 = vld [vmem:[#allocation7 + $0x164] sm:$0x1]
    %v820 = vld [vmem:[#allocation7 + $0x165] sm:$0x1]
    %v821 = vld [vmem:[#allocation7 + $0x166] sm:$0x1]
    %v822 = vld [vmem:[#allocation7 + $0x167] sm:$0x1]
    %v823 = vperm.slane %v815, 0
    %v825 = vsel %vm142, %v793, 0
    %v828 = vsel %vm142, %v794, 0
    %830 = vmatpush.msra.mxu0 0.0
    %831 = vmatpush.msra.mxu0 0.0
    %832 = vmatpush.msra.mxu0 0.0
    %833 = vmatpush.msra.mxu0 0.0
    %834 = vmatpush.msra.mxu0 0.0
    %835 = vmatpush.msra.mxu0 0.0
    %836 = vmatpush.msra.mxu0 0.0
    %837 = vmatpush.msra.mxu0 0.0
    %838 = vmatpush.msra.mxu0 0.0
    %839 = vmatpush.msra.mxu0 0.0
    %840 = vmatpush.msra.mxu0 0.0
    %841 = vmatpush.msra.mxu0 0.0
    %842 = vmatpush.msra.mxu0 %v798
    %843 = vmatpush.msra.mxu0 %v797
    %844 = vmatpush.msra.mxu0 %v796
    %845 = vmatpush.msra.mxu0 %v795
    %846 = vmatmul.f32.gmra.mxu0 %v825
    %v847 = vpop.f32.mrf.mxu0
    %v848 = vadd.f32 %v823, %v847
    %849 = vmatmul.f32.gmra.mxu0 %v828
    %v850 = vpop.f32.mrf.mxu0
    %v851 = vadd.f32 %v823, %v850
    %852 = vdwg.mxu0
    %v853 = vmul.f32 %v848, %v172
    %v854 = vmul.f32 %v848, %v173
    %v855 = vmul.f32 %v848, %v174
    %v856 = vmul.f32 %v848, %v175
    %v857 = vmul.f32 %v851, %v172
    %v858 = vmul.f32 %v851, %v173
    %v859 = vmul.f32 %v851, %v174
    %v860 = vmul.f32 %v851, %v175
    %862 = vrot.lane.b32.xlu0 %v848, 96
    %v863 = vpop.permute.xlu0 %862
    %v865 = vsel %vm142, %v853, 0
    %v868 = vsel %vm142, %v854, 0
    %v871 = vsel %vm142, %v855, 0
    %v874 = vsel %vm142, %v856, 0
    %v876 = vsel %vm142, %v863, 0
    %878 = vmatpush.xpose.msra.mxu0 0.0
    %879 = vmatpush.xpose.msra.mxu0 0.0
    %880 = vmatpush.xpose.msra.mxu0 0.0
    %881 = vmatpush.xpose.msra.mxu0 0.0
    %882 = vmatpush.xpose.msra.mxu0 0.0
    %883 = vmatpush.xpose.msra.mxu0 0.0
    %884 = vmatpush.xpose.msra.mxu0 0.0
    %885 = vmatpush.xpose.msra.mxu0 0.0
    %886 = vmatpush.xpose.msra.mxu0 0.0
    %887 = vmatpush.xpose.msra.mxu0 0.0
    %888 = vmatpush.xpose.msra.mxu0 0.0
    %889 = vmatpush.xpose.msra.mxu0 0.0
    %890 = vmatpush.xpose.msra.mxu0 0.0
    %891 = vmatpush.xpose.msra.mxu0 0.0
    %892 = vmatpush.xpose.msra.mxu0 0.0
    %893 = vmatpush.xpose.msra.mxu0 %v876
    %894 = vmatmul.f32.gmra.mxu0 %v865
    %v895 = vpop.f32.mrf.mxu0
    %v896 = vadd.f32 0.0, %v895
    %897 = vmatmul.f32.gmra.mxu0 %v868
    %v898 = vpop.f32.mrf.mxu0
    %v899 = vadd.f32 0.0, %v898
    %900 = vmatmul.f32.gmra.mxu0 %v871
    %v901 = vpop.f32.mrf.mxu0
    %v902 = vadd.f32 0.0, %v901
    %903 = vmatmul.f32.gmra.mxu0 %v874
    %v904 = vpop.f32.mrf.mxu0
    %v905 = vadd.f32 0.0, %v904
    %906 = vdwg.mxu0
    %908 = vrot.lane.b32.xlu0 %v851, 96
    %v909 = vpop.permute.xlu0 %908
    %v911 = vsel %vm142, %v857, 0
    %v914 = vsel %vm142, %v858, 0
    %v917 = vsel %vm142, %v859, 0
    %v920 = vsel %vm142, %v860, 0
    %v922 = vsel %vm142, %v909, 0
    %924 = vmatpush.xpose.msra.mxu0 0.0
    %925 = vmatpush.xpose.msra.mxu0 0.0
    %926 = vmatpush.xpose.msra.mxu0 0.0
    %927 = vmatpush.xpose.msra.mxu0 0.0
    %928 = vmatpush.xpose.msra.mxu0 0.0
    %929 = vmatpush.xpose.msra.mxu0 0.0
    %930 = vmatpush.xpose.msra.mxu0 0.0
    %931 = vmatpush.xpose.msra.mxu0 0.0
    %932 = vmatpush.xpose.msra.mxu0 0.0
    %933 = vmatpush.xpose.msra.mxu0 0.0
    %934 = vmatpush.xpose.msra.mxu0 0.0
    %935 = vmatpush.xpose.msra.mxu0 0.0
    %936 = vmatpush.xpose.msra.mxu0 0.0
    %937 = vmatpush.xpose.msra.mxu0 0.0
    %938 = vmatpush.xpose.msra.mxu0 0.0
    %939 = vmatpush.xpose.msra.mxu0 %v922
    %940 = vmatmul.f32.gmra.mxu0 %v911
    %v941 = vpop.f32.mrf.mxu0
    %v942 = vadd.f32 0.0, %v941
    %943 = vmatmul.f32.gmra.mxu0 %v914
    %v944 = vpop.f32.mrf.mxu0
    %v945 = vadd.f32 0.0, %v944
    %946 = vmatmul.f32.gmra.mxu0 %v917
    %v947 = vpop.f32.mrf.mxu0
    %v948 = vadd.f32 0.0, %v947
    %949 = vmatmul.f32.gmra.mxu0 %v920
    %v950 = vpop.f32.mrf.mxu0
    %v951 = vadd.f32 0.0, %v950
    %952 = vdwg.mxu0
    %v953 = vmul.f32 %v896, 0.35355338
    %v954 = vmul.f32 %v899, 0.35355338
    %v955 = vmul.f32 %v902, 0.35355338
    %v956 = vmul.f32 %v905, 0.35355338
    %v957 = vmul.f32 %v942, 0.35355338
    %v958 = vmul.f32 %v945, 0.35355338
    %v959 = vmul.f32 %v948, 0.35355338
    %v960 = vmul.f32 %v951, 0.35355338
    %v961 = vsel %vm288, %v953, -inf
    %962 = vmax.xlane.f32.xlu0 %v961
    %v963 = vpop.xlane.xlu0 %962
    %v964 = vsel %vm288, %v954, -inf
    %965 = vmax.xlane.f32.xlu0 %v964
    %v966 = vpop.xlane.xlu0 %965
    %v967 = vsel %vm288, %v955, -inf
    %968 = vmax.xlane.f32.xlu0 %v967
    %v969 = vpop.xlane.xlu0 %968
    %v970 = vsel %vm288, %v956, -inf
    %971 = vmax.xlane.f32.xlu0 %v970
    %v972 = vpop.xlane.xlu0 %971
    %v973 = vsel %vm288, %v957, -inf
    %974 = vmax.xlane.f32.xlu0 %v973
    %v975 = vpop.xlane.xlu0 %974
    %v976 = vsel %vm288, %v958, -inf
    %977 = vmax.xlane.f32.xlu0 %v976
    %v978 = vpop.xlane.xlu0 %977
    %v979 = vsel %vm288, %v959, -inf
    %980 = vmax.xlane.f32.xlu0 %v979
    %v981 = vpop.xlane.xlu0 %980
    %v982 = vsel %vm288, %v960, -inf
    %983 = vmax.xlane.f32.xlu0 %v982
    %v984 = vpop.xlane.xlu0 %983
    %v985 = vsub.f32 %v953, %v963
    %v986 = vsub.f32 %v954, %v966
    %v987 = vsub.f32 %v955, %v969
    %v988 = vsub.f32 %v956, %v972
    %v989 = vsub.f32 %v957, %v975
    %v990 = vsub.f32 %v958, %v978
    %v991 = vsub.f32 %v959, %v981
    %v992 = vsub.f32 %v960, %v984
    %v993 = vmul.f32 %v985, 1.442695
    %v994 = vpow.pop %v993
    %v995 = vmul.f32 %v986, 1.442695
    %v996 = vpow.pop %v995
    %v997 = vmul.f32 %v987, 1.442695
    %v998 = vpow.pop %v997
    %v999 = vmul.f32 %v988, 1.442695
    %v1000 = vpow.pop %v999
    %v1001 = vmul.f32 %v989, 1.442695
    %v1002 = vpow.pop %v1001
    %v1003 = vmul.f32 %v990, 1.442695
    %v1004 = vpow.pop %v1003
    %v1005 = vmul.f32 %v991, 1.442695
    %v1006 = vpow.pop %v1005
    %v1007 = vmul.f32 %v992, 1.442695
    %v1008 = vpow.pop %v1007
    %v1009 = vsel %vm288, %v994, 0.0
    %1010 = vadd.xlane.f32.xlu0 %v1009
    %v1011 = vpop.xlane.xlu0 %1010
    %v1012 = vsel %vm288, %v996, 0.0
    %1013 = vadd.xlane.f32.xlu0 %v1012
    %v1014 = vpop.xlane.xlu0 %1013
    %v1015 = vsel %vm288, %v998, 0.0
    %1016 = vadd.xlane.f32.xlu0 %v1015
    %v1017 = vpop.xlane.xlu0 %1016
    %v1018 = vsel %vm288, %v1000, 0.0
    %1019 = vadd.xlane.f32.xlu0 %v1018
    %v1020 = vpop.xlane.xlu0 %1019
    %v1021 = vsel %vm288, %v1002, 0.0
    %1022 = vadd.xlane.f32.xlu0 %v1021
    %v1023 = vpop.xlane.xlu0 %1022
    %v1024 = vsel %vm288, %v1004, 0.0
    %1025 = vadd.xlane.f32.xlu0 %v1024
    %v1026 = vpop.xlane.xlu0 %1025
    %v1027 = vsel %vm288, %v1006, 0.0
    %1028 = vadd.xlane.f32.xlu0 %v1027
    %v1029 = vpop.xlane.xlu0 %1028
    %v1030 = vsel %vm288, %v1008, 0.0
    %1031 = vadd.xlane.f32.xlu0 %v1030
    %v1032 = vpop.xlane.xlu0 %1031
    %v1033 = vrcp.pop %v1011
    %v1034 = vmul.f32 %v1011, %v1033
    %v1035 = vsub.f32 1.0, %v1034
    %v1036 = vmul.f32 %v1033, %v1035
    %v1037 = vadd.f32 %v1033, %v1036
    %vm1038 = vweird.f32 %v1011
    %vm1039 = vweird.f32 %v1033
    %vm1040 = vmor %vm1038, %vm1039
    %v1041 = vsel %vm1040, %v1033, %v1037
    %v1042 = vand.u32 2147483647, %v1011
    %vm1043 = vcmp.eq.f32.partialorder %v1042, 8.507059e+37
    %v1044 = vand.u32 %v1011, 2147483648
    %v1045 = vor.u32 1.1754944e-38, %v1044
    %v1046 = vsel %vm1043, %v1045, %v1041
    %v1047 = vmul.f32 %v994, %v1046
    %v1048 = vrcp.pop %v1014
    %v1049 = vmul.f32 %v1014, %v1048
    %v1050 = vsub.f32 1.0, %v1049
    %v1051 = vmul.f32 %v1048, %v1050
    %v1052 = vadd.f32 %v1048, %v1051
    %vm1053 = vweird.f32 %v1014
    %vm1054 = vweird.f32 %v1048
    %vm1055 = vmor %vm1053, %vm1054
    %v1056 = vsel %vm1055, %v1048, %v1052
    %v1057 = vand.u32 2147483647, %v1014
    %vm1058 = vcmp.eq.f32.partialorder %v1057, 8.507059e+37
    %v1059 = vand.u32 %v1014, 2147483648
    %v1060 = vor.u32 1.1754944e-38, %v1059
    %v1061 = vsel %vm1058, %v1060, %v1056
    %v1062 = vmul.f32 %v996, %v1061
    %v1063 = vrcp.pop %v1017
    %v1064 = vmul.f32 %v1017, %v1063
    %v1065 = vsub.f32 1.0, %v1064
    %v1066 = vmul.f32 %v1063, %v1065
    %v1067 = vadd.f32 %v1063, %v1066
    %vm1068 = vweird.f32 %v1017
    %vm1069 = vweird.f32 %v1063
    %vm1070 = vmor %vm1068, %vm1069
    %v1071 = vsel %vm1070, %v1063, %v1067
    %v1072 = vand.u32 2147483647, %v1017
    %vm1073 = vcmp.eq.f32.partialorder %v1072, 8.507059e+37
    %v1074 = vand.u32 %v1017, 2147483648
    %v1075 = vor.u32 1.1754944e-38, %v1074
    %v1076 = vsel %vm1073, %v1075, %v1071
    %v1077 = vmul.f32 %v998, %v1076
    %v1078 = vrcp.pop %v1020
    %v1079 = vmul.f32 %v1020, %v1078
    %v1080 = vsub.f32 1.0, %v1079
    %v1081 = vmul.f32 %v1078, %v1080
    %v1082 = vadd.f32 %v1078, %v1081
    %vm1083 = vweird.f32 %v1020
    %vm1084 = vweird.f32 %v1078
    %vm1085 = vmor %vm1083, %vm1084
    %v1086 = vsel %vm1085, %v1078, %v1082
    %v1087 = vand.u32 2147483647, %v1020
    %vm1088 = vcmp.eq.f32.partialorder %v1087, 8.507059e+37
    %v1089 = vand.u32 %v1020, 2147483648
    %v1090 = vor.u32 1.1754944e-38, %v1089
    %v1091 = vsel %vm1088, %v1090, %v1086
    %v1092 = vmul.f32 %v1000, %v1091
    %v1093 = vrcp.pop %v1023
    %v1094 = vmul.f32 %v1023, %v1093
    %v1095 = vsub.f32 1.0, %v1094
    %v1096 = vmul.f32 %v1093, %v1095
    %v1097 = vadd.f32 %v1093, %v1096
    %vm1098 = vweird.f32 %v1023
    %vm1099 = vweird.f32 %v1093
    %vm1100 = vmor %vm1098, %vm1099
    %v1101 = vsel %vm1100, %v1093, %v1097
    %v1102 = vand.u32 2147483647, %v1023
    %vm1103 = vcmp.eq.f32.partialorder %v1102, 8.507059e+37
    %v1104 = vand.u32 %v1023, 2147483648
    %v1105 = vor.u32 1.1754944e-38, %v1104
    %v1106 = vsel %vm1103, %v1105, %v1101
    %v1107 = vmul.f32 %v1002, %v1106
    %v1108 = vrcp.pop %v1026
    %v1109 = vmul.f32 %v1026, %v1108
    %v1110 = vsub.f32 1.0, %v1109
    %v1111 = vmul.f32 %v1108, %v1110
    %v1112 = vadd.f32 %v1108, %v1111
    %vm1113 = vweird.f32 %v1026
    %vm1114 = vweird.f32 %v1108
    %vm1115 = vmor %vm1113, %vm1114
    %v1116 = vsel %vm1115, %v1108, %v1112
    %v1117 = vand.u32 2147483647, %v1026
    %vm1118 = vcmp.eq.f32.partialorder %v1117, 8.507059e+37
    %v1119 = vand.u32 %v1026, 2147483648
    %v1120 = vor.u32 1.1754944e-38, %v1119
    %v1121 = vsel %vm1118, %v1120, %v1116
    %v1122 = vmul.f32 %v1004, %v1121
    %v1123 = vrcp.pop %v1029
    %v1124 = vmul.f32 %v1029, %v1123
    %v1125 = vsub.f32 1.0, %v1124
    %v1126 = vmul.f32 %v1123, %v1125
    %v1127 = vadd.f32 %v1123, %v1126
    %vm1128 = vweird.f32 %v1029
    %vm1129 = vweird.f32 %v1123
    %vm1130 = vmor %vm1128, %vm1129
    %v1131 = vsel %vm1130, %v1123, %v1127
    %v1132 = vand.u32 2147483647, %v1029
    %vm1133 = vcmp.eq.f32.partialorder %v1132, 8.507059e+37
    %v1134 = vand.u32 %v1029, 2147483648
    %v1135 = vor.u32 1.1754944e-38, %v1134
    %v1136 = vsel %vm1133, %v1135, %v1131
    %v1137 = vmul.f32 %v1006, %v1136
    %v1138 = vrcp.pop %v1032
    %v1139 = vmul.f32 %v1032, %v1138
    %v1140 = vsub.f32 1.0, %v1139
    %v1141 = vmul.f32 %v1138, %v1140
    %v1142 = vadd.f32 %v1138, %v1141
    %vm1143 = vweird.f32 %v1032
    %vm1144 = vweird.f32 %v1138
    %vm1145 = vmor %vm1143, %vm1144
    %v1146 = vsel %vm1145, %v1138, %v1142
    %v1147 = vand.u32 2147483647, %v1032
    %vm1148 = vcmp.eq.f32.partialorder %v1147, 8.507059e+37
    %v1149 = vand.u32 %v1032, 2147483648
    %v1150 = vor.u32 1.1754944e-38, %v1149
    %v1151 = vsel %vm1148, %v1150, %v1146
    %v1152 = vmul.f32 %v1008, %v1151
    %1153 = vrot.lane.b32.xlu0 %v848, 64
    %v1154 = vpop.permute.xlu0 %1153
    %v1157 = vsel %vm288, %v1047, 0
    %v1160 = vsel %vm288, %v1062, 0
    %v1163 = vsel %vm288, %v1077, 0
    %v1166 = vsel %vm288, %v1092, 0
    %1168 = vmatpush.msra.mxu0 0.0
    %1169 = vmatpush.msra.mxu0 0.0
    %1170 = vmatpush.msra.mxu0 0.0
    %1171 = vmatpush.msra.mxu0 0.0
    %1172 = vmatpush.msra.mxu0 0.0
    %1173 = vmatpush.msra.mxu0 0.0
    %1174 = vmatpush.msra.mxu0 0.0
    %1175 = vmatpush.msra.mxu0 0.0
    %1176 = vmatpush.msra.mxu0 0.0
    %1177 = vmatpush.msra.mxu0 0.0
    %1178 = vmatpush.msra.mxu0 0.0
    %1179 = vmatpush.msra.mxu0 0.0
    %1180 = vmatpush.msra.mxu0 0.0
    %1181 = vmatpush.msra.mxu0 0.0
    %1182 = vmatpush.msra.mxu0 0.0
    %1183 = vmatpush.msra.mxu0 %v1154
    %1184 = vmatmul.f32.gmra.mxu0 %v1157
    %v1185 = vpop.f32.mrf.mxu0
    %v1186 = vadd.f32 0.0, %v1185
    %1187 = vmatmul.f32.gmra.mxu0 %v1160
    %v1188 = vpop.f32.mrf.mxu0
    %v1189 = vadd.f32 0.0, %v1188
    %1190 = vmatmul.f32.gmra.mxu0 %v1163
    %v1191 = vpop.f32.mrf.mxu0
    %v1192 = vadd.f32 0.0, %v1191
    %1193 = vmatmul.f32.gmra.mxu0 %v1166
    %v1194 = vpop.f32.mrf.mxu0
    %v1195 = vadd.f32 0.0, %v1194
    %1196 = vdwg.mxu0
    %1197 = vrot.lane.b32.xlu0 %v851, 64
    %v1198 = vpop.permute.xlu0 %1197
    %v1201 = vsel %vm288, %v1107, 0
    %v1204 = vsel %vm288, %v1122, 0
    %v1207 = vsel %vm288, %v1137, 0
    %v1210 = vsel %vm288, %v1152, 0
    %1212 = vmatpush.msra.mxu0 0.0
    %1213 = vmatpush.msra.mxu0 0.0
    %1214 = vmatpush.msra.mxu0 0.0
    %1215 = vmatpush.msra.mxu0 0.0
    %1216 = vmatpush.msra.mxu0 0.0
    %1217 = vmatpush.msra.mxu0 0.0
    %1218 = vmatpush.msra.mxu0 0.0
    %1219 = vmatpush.msra.mxu0 0.0
    %1220 = vmatpush.msra.mxu0 0.0
    %1221 = vmatpush.msra.mxu0 0.0
    %1222 = vmatpush.msra.mxu0 0.0
    %1223 = vmatpush.msra.mxu0 0.0
    %1224 = vmatpush.msra.mxu0 0.0
    %1225 = vmatpush.msra.mxu0 0.0
    %1226 = vmatpush.msra.mxu0 0.0
    %1227 = vmatpush.msra.mxu0 %v1198
    %1228 = vmatmul.f32.gmra.mxu0 %v1201
    %v1229 = vpop.f32.mrf.mxu0
    %v1230 = vadd.f32 0.0, %v1229
    %1231 = vmatmul.f32.gmra.mxu0 %v1204
    %v1232 = vpop.f32.mrf.mxu0
    %v1233 = vadd.f32 0.0, %v1232
    %1234 = vmatmul.f32.gmra.mxu0 %v1207
    %v1235 = vpop.f32.mrf.mxu0
    %v1236 = vadd.f32 0.0, %v1235
    %1237 = vmatmul.f32.gmra.mxu0 %v1210
    %v1238 = vpop.f32.mrf.mxu0
    %v1239 = vadd.f32 0.0, %v1238
    %1240 = vdwg.mxu0
    %v1241 = vmul.f32 %v1186, %v172
    %v1242 = vmul.f32 %v1189, %v173
    %v1243 = vmul.f32 %v1192, %v174
    %v1244 = vmul.f32 %v1195, %v175
    %v1245 = vmul.f32 %v1230, %v172
    %v1246 = vmul.f32 %v1233, %v173
    %v1247 = vmul.f32 %v1236, %v174
    %v1248 = vmul.f32 %v1239, %v175
    %v1249 = vsel %vm142, %v1241, 0.0
    %v1250 = vsel %vm142, %v1242, 0.0
    %v1251 = vadd.f32 %v1249, %v1250
    %v1252 = vsel %vm142, %v1243, 0.0
    %v1253 = vadd.f32 %v1251, %v1252
    %v1254 = vsel %vm142, %v1244, 0.0
    %v1255 = vadd.f32 %v1253, %v1254
    %v1256 = vsel %vm142, %v1245, 0.0
    %v1257 = vsel %vm142, %v1246, 0.0
    %v1258 = vadd.f32 %v1256, %v1257
    %v1259 = vsel %vm142, %v1247, 0.0
    %v1260 = vadd.f32 %v1258, %v1259
    %v1261 = vsel %vm142, %v1248, 0.0
    %v1262 = vadd.f32 %v1260, %v1261
    %v1263 = vperm.slane %v816, 0
    %v1265 = vsel %vm142, %v1255, 0
    %v1268 = vsel %vm142, %v1262, 0
    %1270 = vmatpush.msra.mxu0 0.0
    %1271 = vmatpush.msra.mxu0 0.0
    %1272 = vmatpush.msra.mxu0 0.0
    %1273 = vmatpush.msra.mxu0 0.0
    %1274 = vmatpush.msra.mxu0 0.0
    %1275 = vmatpush.msra.mxu0 0.0
    %1276 = vmatpush.msra.mxu0 0.0
    %1277 = vmatpush.msra.mxu0 0.0
    %1278 = vmatpush.msra.mxu0 0.0
    %1279 = vmatpush.msra.mxu0 0.0
    %1280 = vmatpush.msra.mxu0 0.0
    %1281 = vmatpush.msra.mxu0 0.0
    %1282 = vmatpush.msra.mxu0 %v802
    %1283 = vmatpush.msra.mxu0 %v801
    %1284 = vmatpush.msra.mxu0 %v800
    %1285 = vmatpush.msra.mxu0 %v799
    %1286 = vmatmul.f32.gmra.mxu0 %v1265
    %v1287 = vpop.f32.mrf.mxu0
    %v1288 = vadd.f32 %v1263, %v1287
    %1289 = vmatmul.f32.gmra.mxu0 %v1268
    %v1290 = vpop.f32.mrf.mxu0
    %v1291 = vadd.f32 %v1263, %v1290
    %1292 = vdwg.mxu0
    %v1293 = vadd.f32 %v793, %v1288
    %v1294 = vadd.f32 %v794, %v1291
    %v1295 = vsel %vm142, %v1293, 0.0
    %1296 = vadd.xlane.f32.xlu0 %v1295
    %v1297 = vpop.xlane.xlu0 %1296
    %v1298 = vsel %vm142, %v1294, 0.0
    %1299 = vadd.xlane.f32.xlu0 %v1298
    %v1300 = vpop.xlane.xlu0 %1299
    %v1301 = vmul.f32 %v1297, %v635
    %v1302 = vmul.f32 %v1300, %v635
    %v1303 = vsub.f32 %v1293, %v1301
    %v1304 = vsub.f32 %v1294, %v1302
    %v1305 = vmul.f32 %v1303, %v1303
    %v1306 = vmul.f32 %v1304, %v1304
    %v1307 = vsel %vm142, %v1305, 0.0
    %1308 = vadd.xlane.f32.xlu0 %v1307
    %v1309 = vpop.xlane.xlu0 %1308
    %v1310 = vsel %vm142, %v1306, 0.0
    %1311 = vadd.xlane.f32.xlu0 %v1310
    %v1312 = vpop.xlane.xlu0 %1311
    %v1313 = vmul.f32 %v1309, %v635
    %v1314 = vmul.f32 %v1312, %v635
    %v1315 = vadd.f32 %v1313, 1e-05
    %v1316 = vadd.f32 %v1314, 1e-05
    %v1317 = vrsqrt.pop %v1315
    %v1318 = vmul.f32 %v1317, %v1315
    %v1319 = vmul.f32 %v1318, %v1317
    %v1320 = vmul.f32 0.5, %v1319
    %v1321 = vsub.f32 1.5, %v1320
    %v1322 = vmul.f32 %v1317, %v1321
    %vm1323 = vweird.f32 %v1315
    %vm1324 = vweird.f32 %v1317
    %vm1325 = vmor %vm1323, %vm1324
    %v1326 = vsel %vm1325, %v1317, %v1322
    %v1327 = vrsqrt.pop %v1316
    %v1328 = vmul.f32 %v1327, %v1316
    %v1329 = vmul.f32 %v1328, %v1327
    %v1330 = vmul.f32 0.5, %v1329
    %v1331 = vsub.f32 1.5, %v1330
    %v1332 = vmul.f32 %v1327, %v1331
    %vm1333 = vweird.f32 %v1316
    %vm1334 = vweird.f32 %v1327
    %vm1335 = vmor %vm1333, %vm1334
    %v1336 = vsel %vm1335, %v1327, %v1332
    %v1337 = vmul.f32 %v1303, %v1326
    %v1338 = vmul.f32 %v1304, %v1336
    %v1339 = vperm.slane %v819, 0
    %v1340 = vmul.f32 %v1337, %v1339
    %v1341 = vmul.f32 %v1338, %v1339
    %v1342 = vperm.slane %v820, 0
    %v1343 = vadd.f32 %v1340, %v1342
    %v1344 = vadd.f32 %v1341, %v1342
    %v1345 = vperm.slane %v817, 0
    %v1347 = vsel %vm142, %v1343, 0
    %v1350 = vsel %vm142, %v1344, 0
    %1352 = vmatpush.msra.mxu0 0.0
    %1353 = vmatpush.msra.mxu0 0.0
    %1354 = vmatpush.msra.mxu0 0.0
    %1355 = vmatpush.msra.mxu0 0.0
    %1356 = vmatpush.msra.mxu0 0.0
    %1357 = vmatpush.msra.mxu0 0.0
    %1358 = vmatpush.msra.mxu0 0.0
    %1359 = vmatpush.msra.mxu0 0.0
    %1360 = vmatpush.msra.mxu0 0.0
    %1361 = vmatpush.msra.mxu0 0.0
    %1362 = vmatpush.msra.mxu0 0.0
    %1363 = vmatpush.msra.mxu0 0.0
    %1364 = vmatpush.msra.mxu0 %v806
    %1365 = vmatpush.msra.mxu0 %v805
    %1366 = vmatpush.msra.mxu0 %v804
    %1367 = vmatpush.msra.mxu0 %v803
    %1368 = vmatmul.f32.gmra.mxu0 %v1347
    %v1369 = vpop.f32.mrf.mxu0
    %v1370 = vadd.f32 %v1345, %v1369
    %1371 = vmatmul.f32.gmra.mxu0 %v1350
    %v1372 = vpop.f32.mrf.mxu0
    %v1373 = vadd.f32 %v1345, %v1372
    %1374 = vdwg.mxu0
    %v1375 = vmax.f32 %v1370, 0.0
    %v1376 = vmax.f32 %v1373, 0.0
    %v1377 = vperm.slane %v818, 0
    %v1379 = vsel %vm713, %v1375, 0
    %v1382 = vsel %vm713, %v1376, 0
    %1384 = vmatpush.msra.mxu0 0.0
    %1385 = vmatpush.msra.mxu0 0.0
    %1386 = vmatpush.msra.mxu0 0.0
    %1387 = vmatpush.msra.mxu0 0.0
    %1388 = vmatpush.msra.mxu0 0.0
    %1389 = vmatpush.msra.mxu0 0.0
    %1390 = vmatpush.msra.mxu0 0.0
    %1391 = vmatpush.msra.mxu0 0.0
    %1392 = vmatpush.msra.mxu0 %v814
    %1393 = vmatpush.msra.mxu0 %v813
    %1394 = vmatpush.msra.mxu0 %v812
    %1395 = vmatpush.msra.mxu0 %v811
    %1396 = vmatpush.msra.mxu0 %v810
    %1397 = vmatpush.msra.mxu0 %v809
    %1398 = vmatpush.msra.mxu0 %v808
    %1399 = vmatpush.msra.mxu0 %v807
    %1400 = vmatmul.f32.gmra.mxu0 %v1379
    %v1401 = vpop.f32.mrf.mxu0
    %v1402 = vadd.f32 %v1377, %v1401
    %1403 = vmatmul.f32.gmra.mxu0 %v1382
    %v1404 = vpop.f32.mrf.mxu0
    %v1405 = vadd.f32 %v1377, %v1404
    %1406 = vdwg.mxu0
    %v1407 = vadd.f32 %v1343, %v1402
    %v1408 = vadd.f32 %v1344, %v1405
    %v1409 = vsel %vm142, %v1407, 0.0
    %1410 = vadd.xlane.f32.xlu0 %v1409
    %v1411 = vpop.xlane.xlu0 %1410
    %v1412 = vsel %vm142, %v1408, 0.0
    %1413 = vadd.xlane.f32.xlu0 %v1412
    %v1414 = vpop.xlane.xlu0 %1413
    %v1415 = vmul.f32 %v1411, %v635
    %v1416 = vmul.f32 %v1414, %v635
    %v1417 = vsub.f32 %v1407, %v1415
    %v1418 = vsub.f32 %v1408, %v1416
    %v1419 = vmul.f32 %v1417, %v1417
    %v1420 = vmul.f32 %v1418, %v1418
    %v1421 = vsel %vm142, %v1419, 0.0
    %1422 = vadd.xlane.f32.xlu0 %v1421
    %v1423 = vpop.xlane.xlu0 %1422
    %v1424 = vsel %vm142, %v1420, 0.0
    %1425 = vadd.xlane.f32.xlu0 %v1424
    %v1426 = vpop.xlane.xlu0 %1425
    %v1427 = vmul.f32 %v1423, %v635
    %v1428 = vmul.f32 %v1426, %v635
    %v1429 = vadd.f32 %v1427, 1e-05
    %v1430 = vadd.f32 %v1428, 1e-05
    %v1431 = vrsqrt.pop %v1429
    %v1432 = vmul.f32 %v1431, %v1429
    %v1433 = vmul.f32 %v1432, %v1431
    %v1434 = vmul.f32 0.5, %v1433
    %v1435 = vsub.f32 1.5, %v1434
    %v1436 = vmul.f32 %v1431, %v1435
    %vm1437 = vweird.f32 %v1429
    %vm1438 = vweird.f32 %v1431
    %vm1439 = vmor %vm1437, %vm1438
    %v1440 = vsel %vm1439, %v1431, %v1436
    %v1441 = vrsqrt.pop %v1430
    %v1442 = vmul.f32 %v1441, %v1430
    %v1443 = vmul.f32 %v1442, %v1441
    %v1444 = vmul.f32 0.5, %v1443
    %v1445 = vsub.f32 1.5, %v1444
    %v1446 = vmul.f32 %v1441, %v1445
    %vm1447 = vweird.f32 %v1430
    %vm1448 = vweird.f32 %v1441
    %vm1449 = vmor %vm1447, %vm1448
    %v1450 = vsel %vm1449, %v1441, %v1446
    %v1451 = vmul.f32 %v1417, %v1440
    %v1452 = vmul.f32 %v1418, %v1450
    %v1453 = vperm.slane %v821, 0
    %v1454 = vmul.f32 %v1451, %v1453
    %v1455 = vmul.f32 %v1452, %v1453
    %v1456 = vperm.slane %v822, 0
    %v1457 = vadd.f32 %v1454, %v1456
    %v1458 = vadd.f32 %v1455, %v1456
    %1459 = vst.msk [vmem:[#allocation8] sm:$0xff] %vm142, %v1457
    %1460 = vst.msk [vmem:[#allocation8 + $0x8] sm:$0xff] %vm142, %v1458
    // Predicated region
    $region26: #{tpu_custom_call.1} parent=1 // pred_check
      _
    $region27: #{tpu_custom_call.1} parent=1 // pred_check_branch
      %1462 = sbr.rel (0) target = $region29
    $region28: #{tpu_custom_call.1} parent=1 // pred_region
      %1464 = vsyncadd [#allocation4], 0
      %s1465 = sshll.u32 [#allocation8], 4
      %s1466 = int_to_ptr.vmem [resolvable:$true] %s1465
      %s1467 = sshll.u32 %s3, 4
      %s1468 = int_to_ptr.hbm [resolvable:$true] %s1467
      %1473 = dma.vmem_to_hbm [thread:$0]  %s1466, 256, %s1468, [#allocation4], 128, 128, 8
    $region29: #{tpu_custom_call.1} parent=1 // pred_fallthru
      _
    // Predicated region
    $region30: #{tpu_custom_call.1} parent=1 // pred_check
      _
    $region31: #{tpu_custom_call.1} parent=1 // pred_check_branch
      %1475 = sbr.rel (0) target = $region33
    $region32: #{tpu_custom_call.1} parent=1 // pred_region
      %1477 = dma.done [#allocation4], 256
    $region33: #{tpu_custom_call.1} parent=1 // pred_fallthru
      _
    %1478 = vsyncpa [#allocation3], 1
    %1479 = vsyncpa [#allocation6], 1
    %1480 = vsyncpa [#allocation4], 1

</llo_original>
